<compile_context>
chip_gen: v7x
topology: tpu7x:2x2x1
jax: 0.10.0
libtpu: 0.0.40
codegen_flags: <defaults>
</compile_context>

<pallas_src>
import functools

import numpy as np
import jax
import jax.numpy as jnp
from jax.experimental import pallas as pl
from jax.experimental.pallas import tpu as pltpu

ELEM_LIST = ['C', 'N', 'O', 'S', 'F', 'Si', 'P', 'Cl', 'Br', 'Mg', 'Na', 'Ca',
             'Fe', 'Al', 'I', 'B', 'K', 'Se', 'Zn', 'H', 'Cu', 'Mn', 'unknown']
ATOM_FDIM = len(ELEM_LIST) + 6 + 5 + 4 + 1      # 39
BOND_FDIM = 5 + 6                               # 11


def _round_up(x, m):
    return ((x + m - 1) // m) * m


def _pad2d(x, rows, cols, dtype):
    x = jnp.asarray(x)
    r, c = x.shape
    return jnp.pad(x, ((0, rows - r), (0, cols - c))).astype(dtype)


def mpn_kernel(fbonds_ref, abond_ref, fatoms_ref, aatom_ref, pool_ref,
               wi_ref, wh_ref, woa_ref, won_ref, bo_ref,
               out_ref,
               binput_ref, msg_old_ref, msg_new_ref,
               *, depth, tile_b, n_tiles):
    d = pl.program_id(0)                 # depth phase: 0 = init, 1..depth-1 = updates
    t = pl.program_id(1)                 # bond row tile
    row0 = pl.multiple_of(t * tile_b, tile_b)

    # ---- d == 0: binput = W_i(fbonds); message_0 = relu(binput) ------------
    @pl.when(d == 0)
    def _init():
        b = jnp.dot(fbonds_ref[...], wi_ref[...],
                    preferred_element_type=jnp.float32)          # (tile_b, Hp) f32
        binput_ref[pl.ds(row0, tile_b), :] = b
        msg_old_ref[pl.ds(row0, tile_b), :] = (
            jnp.maximum(b, 0.0).astype(msg_old_ref.dtype))

    # ---- promote message_{d-1} (in msg_new) before depth step d >= 2 -------
    @pl.when(jnp.logical_and(d >= 2, t == 0))
    def _promote():
        msg_old_ref[...] = msg_new_ref[...]

    # ---- message update: m_d = relu(binput + W_h(A_bond @ m_{d-1})) --------
    @pl.when(d > 0)
    def _step():
        nei = jnp.dot(abond_ref[...], msg_old_ref[...],
                      preferred_element_type=jnp.float32)        # (tile_b, Hp) f32
        nei = jnp.dot(nei.astype(jnp.bfloat16), wh_ref[...],
                      preferred_element_type=jnp.float32)
        b = binput_ref[pl.ds(row0, tile_b), :]
        msg_new_ref[pl.ds(row0, tile_b), :] = (
            jnp.maximum(b + nei, 0.0).astype(msg_new_ref.dtype))

    # ---- epilogue: atom aggregation, W_o + ReLU, per-molecule mean pooling --
    @pl.when(jnp.logical_and(d == depth - 1, t == n_tiles - 1))
    def _epilogue():
        final_ref = msg_new_ref if depth > 1 else msg_old_ref    # static choice
        msg = final_ref[...]                                     # (NBp, Hp) bf16
        nei_atom = jnp.dot(aatom_ref[...], msg,
                           preferred_element_type=jnp.float32)   # (NAp, Hp) f32
        atom_h = (jnp.dot(fatoms_ref[...], woa_ref[...],
                          preferred_element_type=jnp.float32)
                  + jnp.dot(nei_atom.astype(jnp.bfloat16), won_ref[...],
                            preferred_element_type=jnp.float32)
                  + bo_ref[...])
        atom_h = jnp.maximum(atom_h, 0.0)                        # (NAp, Hp) f32
        # mean pooling (pool rows carry 1/len on each molecule's atoms)
        out_ref[...] = jnp.dot(pool_ref[...], atom_h,
                               preferred_element_type=jnp.float32)


def mpn_forward(fatoms, fbonds, agraph, bgraph, scope, params, depth):
    """params = dict(W_i (H,AF+BF), W_h (H,H), W_o (H,AF+H), b_o (H,))."""
    NA = fatoms.shape[0]
    NB = fbonds.shape[0]
    NM = len(scope)
    H = params["W_i"].shape[0]

    # lane-dense padding
    Hp = _round_up(H, 128)
    Fp = _round_up(ATOM_FDIM + BOND_FDIM, 128)
    AFp = _round_up(ATOM_FDIM, 128)
    NBp = _round_up(max(NB, 1), 128)
    NAp = _round_up(max(NA, 1), 128)
    NMp = _round_up(max(NM, 1), 8)

    tile_b = 256 if NBp % 256 == 0 else 128
    n_tiles = NBp // tile_b

    agraph = jnp.asarray(agraph, jnp.int32)
    bgraph = jnp.asarray(bgraph, jnp.int32)

    # --- adjacency via scatter-add (exact integer counts -> bf16 exact) -----
    brows = jnp.arange(NB, dtype=jnp.int32)[:, None]
    a_bond = jnp.zeros((NB, NBp), jnp.float32).at[brows, bgraph].add(1.0)
    a_bond = _pad2d(a_bond, NBp, NBp, jnp.bfloat16)              # (NBp, NBp)

    arows = jnp.arange(NA, dtype=jnp.int32)[:, None]
    a_atom = jnp.zeros((NA, NBp), jnp.float32).at[arows, agraph].add(1.0)
    a_atom = _pad2d(a_atom, NAp, NBp, jnp.bfloat16)              # (NAp, NBp)

    # --- per-molecule mean-pooling matrix (vectorized, f32) -----------------
    starts = jnp.array([s for s, _ in scope], dtype=jnp.int32)
    lens = jnp.array([l for _, l in scope], dtype=jnp.int32)
    atom_ids = jnp.arange(NAp, dtype=jnp.int32)
    member = ((atom_ids[None, :] >= starts[:, None]) &
              (atom_ids[None, :] < (starts + lens)[:, None])).astype(jnp.float32)
    pool = member / lens[:, None].astype(jnp.float32)
    pool = jnp.pad(pool, ((0, NMp - NM), (0, 0)))                # (NMp, NAp) f32

    # --- padded inputs / weights (bf16 matmul operands) ---------------------
    fbonds_p = _pad2d(fbonds, NBp, Fp, jnp.bfloat16)
    fatoms_p = _pad2d(fatoms, NAp, AFp, jnp.bfloat16)
    wi_t = _pad2d(params["W_i"].T, Fp, Hp, jnp.bfloat16)
    wh_t = _pad2d(params["W_h"].T, Hp, Hp, jnp.bfloat16)
    woa_t = _pad2d(params["W_o"][:, :ATOM_FDIM].T, AFp, Hp, jnp.bfloat16)
    won_t = _pad2d(params["W_o"][:, ATOM_FDIM:].T, Hp, Hp, jnp.bfloat16)
    bo = jnp.pad(jnp.asarray(params["b_o"], jnp.float32), (0, Hp - H)).reshape(1, Hp)

    def tile_rows(dd, tt):
        return (tt, 0)

    def whole(dd, tt):
        return (0, 0)

    in_specs = [
        pl.BlockSpec((tile_b, Fp), tile_rows),     # fbonds row tiles
        pl.BlockSpec((tile_b, NBp), tile_rows),    # A_bond row tiles (streamed)
        pl.BlockSpec((NAp, AFp), whole),           # fatoms (resident)
        pl.BlockSpec((NAp, NBp), whole),           # A_atom (resident)
        pl.BlockSpec((NMp, NAp), whole),           # pool
        pl.BlockSpec((Fp, Hp), whole),             # W_i^T
        pl.BlockSpec((Hp, Hp), whole),             # W_h^T
        pl.BlockSpec((AFp, Hp), whole),            # W_o (atom part)^T
        pl.BlockSpec((Hp, Hp), whole),             # W_o (nei part)^T
        pl.BlockSpec((1, Hp), whole),              # b_o
    ]
    out_spec = pl.BlockSpec((NMp, Hp), whole)

    scratch = [
        pltpu.VMEM((NBp, Hp), jnp.float32),        # binput (f32)
        pltpu.VMEM((NBp, Hp), jnp.bfloat16),       # message (old)
        pltpu.VMEM((NBp, Hp), jnp.bfloat16),       # message (new)
    ]

    flops = (2 * NBp * Fp * Hp
             + (depth - 1) * (2 * NBp * NBp * Hp + 2 * NBp * Hp * Hp)
             + 2 * NAp * NBp * Hp
             + 2 * NAp * (AFp + Hp) * Hp
             + 2 * NMp * NAp * Hp)
    bytes_accessed = int(
        fbonds_p.size * 2 + a_bond.size * 2 * max(depth, 1) + fatoms_p.size * 2
        + a_atom.size * 2 + pool.size * 4
        + (wi_t.size + wh_t.size + woa_t.size + won_t.size) * 2
        + bo.size * 4 + NMp * Hp * 4)

    out = pl.pallas_call(
        functools.partial(mpn_kernel, depth=depth, tile_b=tile_b, n_tiles=n_tiles),
        out_shape=jax.ShapeDtypeStruct((NMp, Hp), jnp.float32),
        grid_spec=pltpu.PrefetchScalarGridSpec(
            num_scalar_prefetch=0,
            grid=(depth, n_tiles),
            in_specs=in_specs,
            out_specs=out_spec,
            scratch_shapes=scratch),
        compiler_params=pltpu.CompilerParams(
            dimension_semantics=("arbitrary", "arbitrary"),
            vmem_limit_bytes=48 * 1024 * 1024),
        cost_estimate=pl.CostEstimate(flops=flops, transcendentals=0,
                                      bytes_accessed=bytes_accessed),
    )(fbonds_p, a_bond, fatoms_p, a_atom, pool,
      wi_t, wh_t, woa_t, won_t, bo)

    return out[:NM, :H]


def mpn_reference(fatoms, fbonds, agraph, bgraph, scope, params, depth):
    """Pure-JAX f32 replica of the PyTorch forward (for verification)."""
    binput = fbonds @ params["W_i"].T
    message = jnp.maximum(binput, 0.0)
    for _ in range(depth - 1):
        nei = message[bgraph].sum(axis=1)
        nei = nei @ params["W_h"].T
        message = jnp.maximum(binput + nei, 0.0)
    nei_a = message[agraph].sum(axis=1)
    ainput = jnp.concatenate([fatoms, nei_a], axis=1)
    atom_h = jnp.maximum(ainput @ params["W_o"].T + params["b_o"], 0.0)
    return jnp.stack([atom_h[st:st + le].sum(0) / le for st, le in scope])


if __name__ == "__main__":
    hidden, depth = 32, 3
    n_atoms, n_bonds, max_nb = 16, 24, 6
    scope = [(0, 7), (7, 9)]                      # 2 molecules

    key = jax.random.PRNGKey(0)
    k1, k2, k3, k4, k5, k6, k7, k8 = jax.random.split(key, 8)

    fatoms = jax.random.normal(k1, (n_atoms, ATOM_FDIM), jnp.float32)
    fbonds = jax.random.normal(k2, (n_bonds, ATOM_FDIM + BOND_FDIM), jnp.float32)
    agraph = jax.random.randint(k3, (n_atoms, max_nb), 0, n_bonds, jnp.int32)
    bgraph = jax.random.randint(k4, (n_bonds, max_nb), 0, n_bonds, jnp.int32)

    params = {
        "W_i": 0.1 * jax.random.normal(k5, (hidden, ATOM_FDIM + BOND_FDIM), jnp.float32),
        "W_h": 0.1 * jax.random.normal(k6, (hidden, hidden), jnp.float32),
        "W_o": 0.1 * jax.random.normal(k7, (hidden, ATOM_FDIM + hidden), jnp.float32),
        "b_o": 0.1 * jax.random.normal(k8, (hidden,), jnp.float32),
    }

    out = mpn_forward(fatoms, fbonds, agraph, bgraph, scope, params, depth)
    out = jax.block_until_ready(out)

    ref = mpn_reference(fatoms, fbonds, agraph, bgraph, scope, params, depth)
    np.testing.assert_allclose(np.asarray(out), np.asarray(ref), rtol=5e-2, atol=5e-2)

    print("KERNEL_OK")
</pallas_src>

<mosaic_0001>
module attributes {stable_mosaic.version = 11 : i64} {
  func.func @mpn_kernel(%arg0: i32, %arg1: i32, %arg2: memref<128x128xbf16, #tpu.memory_space<vmem>>, %arg3: memref<128x128xbf16, #tpu.memory_space<vmem>>, %arg4: memref<128x128xbf16, #tpu.memory_space<vmem>>, %arg5: memref<128x128xbf16, #tpu.memory_space<vmem>>, %arg6: memref<8x128xf32, #tpu.memory_space<vmem>>, %arg7: memref<128x128xbf16, #tpu.memory_space<vmem>>, %arg8: memref<128x128xbf16, #tpu.memory_space<vmem>>, %arg9: memref<128x128xbf16, #tpu.memory_space<vmem>>, %arg10: memref<128x128xbf16, #tpu.memory_space<vmem>>, %arg11: memref<1x128xf32, #tpu.memory_space<vmem>>, %arg12: memref<8x128xf32, #tpu.memory_space<vmem>>, %arg13: memref<128x128xf32, #tpu.memory_space<vmem>>, %arg14: memref<128x128xbf16, #tpu.memory_space<vmem>>, %arg15: memref<128x128xbf16, #tpu.memory_space<vmem>>) attributes {dimension_semantics = [#tpu.dimension_semantics<arbitrary>, #tpu.dimension_semantics<arbitrary>], iteration_bounds = array<i64: 3, 1>, scalar_prefetch = 0 : i64, scratch_operands = 3 : i64, tpu.core_type = #tpu.core_type<tc>, window_params = [{transform_indices = @transform_0, window_bounds = array<i64: 128, 128>}, {transform_indices = @transform_1, window_bounds = array<i64: 128, 128>}, {pipeline_mode = #tpu.pipeline_mode<synchronous>, transform_indices = @transform_2, window_bounds = array<i64: 128, 128>}, {pipeline_mode = #tpu.pipeline_mode<synchronous>, transform_indices = @transform_3, window_bounds = array<i64: 128, 128>}, {pipeline_mode = #tpu.pipeline_mode<synchronous>, transform_indices = @transform_4, window_bounds = array<i64: 8, 128>}, {pipeline_mode = #tpu.pipeline_mode<synchronous>, transform_indices = @transform_5, window_bounds = array<i64: 128, 128>}, {pipeline_mode = #tpu.pipeline_mode<synchronous>, transform_indices = @transform_6, window_bounds = array<i64: 128, 128>}, {pipeline_mode = #tpu.pipeline_mode<synchronous>, transform_indices = @transform_7, window_bounds = array<i64: 128, 128>}, {pipeline_mode = #tpu.pipeline_mode<synchronous>, transform_indices = @transform_8, window_bounds = array<i64: 128, 128>}, {pipeline_mode = #tpu.pipeline_mode<synchronous>, transform_indices = @transform_9, window_bounds = array<i64: 1, 128>}, {pipeline_mode = #tpu.pipeline_mode<synchronous>, transform_indices = @transform_10, window_bounds = array<i64: 8, 128>}]} {
    %c128_i32 = arith.constant 128 : i32
    %0 = arith.muli %arg1, %c128_i32 : i32
    %1 = tpu.assume_multiple %0, 128 : i32
    %c0_i32 = arith.constant 0 : i32
    %2 = arith.cmpi eq, %arg0, %c0_i32 : i32
    %3 = arith.extui %2 : i1 to i32
    %c0_i32_0 = arith.constant 0 : i32
    %4 = arith.cmpi ne, %3, %c0_i32_0 : i32
    scf.if %4 {
      %c0 = arith.constant 0 : index
      %c0_8 = arith.constant 0 : index
      %18 = vector.load %arg2[%c0, %c0_8] : memref<128x128xbf16, #tpu.memory_space<vmem>>, vector<128x128xbf16>
      %c0_9 = arith.constant 0 : index
      %c0_10 = arith.constant 0 : index
      %19 = vector.load %arg7[%c0_9, %c0_10] : memref<128x128xbf16, #tpu.memory_space<vmem>>, vector<128x128xbf16>
      %cst = arith.constant dense<0.000000e+00> : vector<128x128xf32>
      %20 = tpu.matmul %18, %19, %cst {dimension_numbers = #tpu.dot_dimension_numbers<[1], [0], [0], [1], [0, 0, 1, 1], [], []>} : vector<128x128xbf16>, vector<128x128xbf16>, vector<128x128xf32> -> vector<128x128xf32>
      %21 = arith.index_cast %1 : i32 to index
      %c0_11 = arith.constant 0 : index
      %22 = vector.load %arg13[%21, %c0_11] : memref<128x128xf32, #tpu.memory_space<vmem>>, vector<128x128xf32>
      tpu.vector_store %arg13[%21, %c0_11], %20 {strides = array<i32>} : memref<128x128xf32, #tpu.memory_space<vmem>>, vector<128x128xf32>,
      %cst_12 = arith.constant 0.000000e+00 : f32
      %23 = vector.broadcast %cst_12 : f32 to vector<128x128xf32>
      %24 = arith.maximumf %20, %23 : vector<128x128xf32>
      %25 = arith.truncf %24 : vector<128x128xf32> to vector<128x128xbf16>
      %26 = arith.index_cast %1 : i32 to index
      %c0_13 = arith.constant 0 : index
      %27 = vector.load %arg14[%26, %c0_13] : memref<128x128xbf16, #tpu.memory_space<vmem>>, vector<128x128xbf16>
      tpu.vector_store %arg14[%26, %c0_13], %25 {strides = array<i32>} : memref<128x128xbf16, #tpu.memory_space<vmem>>, vector<128x128xbf16>,
    } else {
    }
    %c2_i32 = arith.constant 2 : i32
    %5 = arith.cmpi sge, %arg0, %c2_i32 : i32
    %c0_i32_1 = arith.constant 0 : i32
    %6 = arith.cmpi eq, %arg1, %c0_i32_1 : i32
    %7 = arith.andi %5, %6 : i1
    %8 = arith.extui %7 : i1 to i32
    %c0_i32_2 = arith.constant 0 : i32
    %9 = arith.cmpi ne, %8, %c0_i32_2 : i32
    scf.if %9 {
      %c0 = arith.constant 0 : index
      %c0_8 = arith.constant 0 : index
      %18 = vector.load %arg15[%c0, %c0_8] : memref<128x128xbf16, #tpu.memory_space<vmem>>, vector<128x128xbf16>
      %c0_9 = arith.constant 0 : index
      %c0_10 = arith.constant 0 : index
      %19 = vector.load %arg14[%c0_9, %c0_10] : memref<128x128xbf16, #tpu.memory_space<vmem>>, vector<128x128xbf16>
      tpu.vector_store %arg14[%c0_9, %c0_10], %18 {strides = array<i32>} : memref<128x128xbf16, #tpu.memory_space<vmem>>, vector<128x128xbf16>,
    } else {
    }
    %c0_i32_3 = arith.constant 0 : i32
    %10 = arith.cmpi sgt, %arg0, %c0_i32_3 : i32
    %11 = arith.extui %10 : i1 to i32
    %c0_i32_4 = arith.constant 0 : i32
    %12 = arith.cmpi ne, %11, %c0_i32_4 : i32
    scf.if %12 {
      %c0 = arith.constant 0 : index
      %c0_8 = arith.constant 0 : index
      %18 = vector.load %arg3[%c0, %c0_8] : memref<128x128xbf16, #tpu.memory_space<vmem>>, vector<128x128xbf16>
      %c0_9 = arith.constant 0 : index
      %c0_10 = arith.constant 0 : index
      %19 = vector.load %arg14[%c0_9, %c0_10] : memref<128x128xbf16, #tpu.memory_space<vmem>>, vector<128x128xbf16>
      %cst = arith.constant dense<0.000000e+00> : vector<128x128xf32>
      %20 = tpu.matmul %18, %19, %cst {dimension_numbers = #tpu.dot_dimension_numbers<[1], [0], [0], [1], [0, 0, 1, 1], [], []>} : vector<128x128xbf16>, vector<128x128xbf16>, vector<128x128xf32> -> vector<128x128xf32>
      %21 = arith.truncf %20 : vector<128x128xf32> to vector<128x128xbf16>
      %c0_11 = arith.constant 0 : index
      %c0_12 = arith.constant 0 : index
      %22 = vector.load %arg8[%c0_11, %c0_12] : memref<128x128xbf16, #tpu.memory_space<vmem>>, vector<128x128xbf16>
      %cst_13 = arith.constant dense<0.000000e+00> : vector<128x128xf32>
      %23 = tpu.matmul %21, %22, %cst_13 {dimension_numbers = #tpu.dot_dimension_numbers<[1], [0], [0], [1], [0, 0, 1, 1], [], []>} : vector<128x128xbf16>, vector<128x128xbf16>, vector<128x128xf32> -> vector<128x128xf32>
      %24 = arith.index_cast %1 : i32 to index
      %c0_14 = arith.constant 0 : index
      %25 = vector.load %arg13[%24, %c0_14] : memref<128x128xf32, #tpu.memory_space<vmem>>, vector<128x128xf32>
      %26 = arith.addf %25, %23 : vector<128x128xf32>
      %cst_15 = arith.constant 0.000000e+00 : f32
      %27 = vector.broadcast %cst_15 : f32 to vector<128x128xf32>
      %28 = arith.maximumf %26, %27 : vector<128x128xf32>
      %29 = arith.truncf %28 : vector<128x128xf32> to vector<128x128xbf16>
      %30 = arith.index_cast %1 : i32 to index
      %c0_16 = arith.constant 0 : index
      %31 = vector.load %arg15[%30, %c0_16] : memref<128x128xbf16, #tpu.memory_space<vmem>>, vector<128x128xbf16>
      tpu.vector_store %arg15[%30, %c0_16], %29 {strides = array<i32>} : memref<128x128xbf16, #tpu.memory_space<vmem>>, vector<128x128xbf16>,
    } else {
    }
    %c2_i32_5 = arith.constant 2 : i32
    %13 = arith.cmpi eq, %arg0, %c2_i32_5 : i32
    %c0_i32_6 = arith.constant 0 : i32
    %14 = arith.cmpi eq, %arg1, %c0_i32_6 : i32
    %15 = arith.andi %13, %14 : i1
    %16 = arith.extui %15 : i1 to i32
    %c0_i32_7 = arith.constant 0 : i32
    %17 = arith.cmpi ne, %16, %c0_i32_7 : i32
    scf.if %17 {
      %c0 = arith.constant 0 : index
      %c0_8 = arith.constant 0 : index
      %18 = vector.load %arg15[%c0, %c0_8] : memref<128x128xbf16, #tpu.memory_space<vmem>>, vector<128x128xbf16>
      %c0_9 = arith.constant 0 : index
      %c0_10 = arith.constant 0 : index
      %19 = vector.load %arg5[%c0_9, %c0_10] : memref<128x128xbf16, #tpu.memory_space<vmem>>, vector<128x128xbf16>
      %cst = arith.constant dense<0.000000e+00> : vector<128x128xf32>
      %20 = tpu.matmul %19, %18, %cst {dimension_numbers = #tpu.dot_dimension_numbers<[1], [0], [0], [1], [0, 0, 1, 1], [], []>} : vector<128x128xbf16>, vector<128x128xbf16>, vector<128x128xf32> -> vector<128x128xf32>
      %c0_11 = arith.constant 0 : index
      %c0_12 = arith.constant 0 : index
      %21 = vector.load %arg4[%c0_11, %c0_12] : memref<128x128xbf16, #tpu.memory_space<vmem>>, vector<128x128xbf16>
      %c0_13 = arith.constant 0 : index
      %c0_14 = arith.constant 0 : index
      %22 = vector.load %arg9[%c0_13, %c0_14] : memref<128x128xbf16, #tpu.memory_space<vmem>>, vector<128x128xbf16>
      %cst_15 = arith.constant dense<0.000000e+00> : vector<128x128xf32>
      %23 = tpu.matmul %21, %22, %cst_15 {dimension_numbers = #tpu.dot_dimension_numbers<[1], [0], [0], [1], [0, 0, 1, 1], [], []>} : vector<128x128xbf16>, vector<128x128xbf16>, vector<128x128xf32> -> vector<128x128xf32>
      %24 = arith.truncf %20 : vector<128x128xf32> to vector<128x128xbf16>
      %c0_16 = arith.constant 0 : index
      %c0_17 = arith.constant 0 : index
      %25 = vector.load %arg10[%c0_16, %c0_17] : memref<128x128xbf16, #tpu.memory_space<vmem>>, vector<128x128xbf16>
      %cst_18 = arith.constant dense<0.000000e+00> : vector<128x128xf32>
      %26 = tpu.matmul %24, %25, %cst_18 {dimension_numbers = #tpu.dot_dimension_numbers<[1], [0], [0], [1], [0, 0, 1, 1], [], []>} : vector<128x128xbf16>, vector<128x128xbf16>, vector<128x128xf32> -> vector<128x128xf32>
      %27 = arith.addf %23, %26 : vector<128x128xf32>
      %c0_19 = arith.constant 0 : index
      %c0_20 = arith.constant 0 : index
      %28 = vector.load %arg11[%c0_19, %c0_20] : memref<1x128xf32, #tpu.memory_space<vmem>>, vector<1x128xf32>
      %29 = vector.broadcast %28 : vector<1x128xf32> to vector<128x128xf32>
      %30 = arith.addf %27, %29 : vector<128x128xf32>
      %cst_21 = arith.constant 0.000000e+00 : f32
      %31 = vector.broadcast %cst_21 : f32 to vector<128x128xf32>
      %32 = arith.maximumf %30, %31 : vector<128x128xf32>
      %c0_22 = arith.constant 0 : index
      %c0_23 = arith.constant 0 : index
      %33 = vector.load %arg6[%c0_22, %c0_23] : memref<8x128xf32, #tpu.memory_space<vmem>>, vector<8x128xf32>
      %cst_24 = arith.constant dense<0.000000e+00> : vector<8x128xf32>
      %34 = tpu.matmul %33, %32, %cst_24 {dimension_numbers = #tpu.dot_dimension_numbers<[1], [0], [0], [1], [0, 0, 1, 1], [], []>} : vector<8x128xf32>, vector<128x128xf32>, vector<8x128xf32> -> vector<8x128xf32>
      %c0_25 = arith.constant 0 : index
      %c0_26 = arith.constant 0 : index
      %35 = vector.load %arg12[%c0_25, %c0_26] : memref<8x128xf32, #tpu.memory_space<vmem>>, vector<8x128xf32>
      tpu.vector_store %arg12[%c0_25, %c0_26], %34 {strides = array<i32>} : memref<8x128xf32, #tpu.memory_space<vmem>>, vector<8x128xf32>,
    } else {
    }
    return
  }
  func.func @transform_0(%arg0: i32, %arg1: i32) -> (i32, i32) {
    %c0_i32 = arith.constant 0 : i32
    %c0_i32_0 = arith.constant 0 : i32
    return %arg1, %c0_i32 : i32, i32
  }
  func.func @transform_1(%arg0: i32, %arg1: i32) -> (i32, i32) {
    %c0_i32 = arith.constant 0 : i32
    %c0_i32_0 = arith.constant 0 : i32
    return %arg1, %c0_i32 : i32, i32
  }
  func.func @transform_2(%arg0: i32, %arg1: i32) -> (i32, i32) {
    %c0_i32 = arith.constant 0 : i32
    %c0_i32_0 = arith.constant 0 : i32
    %c0_i32_1 = arith.constant 0 : i32
    return %c0_i32, %c0_i32_0 : i32, i32
  }
  func.func @transform_3(%arg0: i32, %arg1: i32) -> (i32, i32) {
    %c0_i32 = arith.constant 0 : i32
    %c0_i32_0 = arith.constant 0 : i32
    %c0_i32_1 = arith.constant 0 : i32
    return %c0_i32, %c0_i32_0 : i32, i32
  }
  func.func @transform_4(%arg0: i32, %arg1: i32) -> (i32, i32) {
    %c0_i32 = arith.constant 0 : i32
    %c0_i32_0 = arith.constant 0 : i32
    %c0_i32_1 = arith.constant 0 : i32
    return %c0_i32, %c0_i32_0 : i32, i32
  }
  func.func @transform_5(%arg0: i32, %arg1: i32) -> (i32, i32) {
    %c0_i32 = arith.constant 0 : i32
    %c0_i32_0 = arith.constant 0 : i32
    %c0_i32_1 = arith.constant 0 : i32
    return %c0_i32, %c0_i32_0 : i32, i32
  }
  func.func @transform_6(%arg0: i32, %arg1: i32) -> (i32, i32) {
    %c0_i32 = arith.constant 0 : i32
    %c0_i32_0 = arith.constant 0 : i32
    %c0_i32_1 = arith.constant 0 : i32
    return %c0_i32, %c0_i32_0 : i32, i32
  }
  func.func @transform_7(%arg0: i32, %arg1: i32) -> (i32, i32) {
    %c0_i32 = arith.constant 0 : i32
    %c0_i32_0 = arith.constant 0 : i32
    %c0_i32_1 = arith.constant 0 : i32
    return %c0_i32, %c0_i32_0 : i32, i32
  }
  func.func @transform_8(%arg0: i32, %arg1: i32) -> (i32, i32) {
    %c0_i32 = arith.constant 0 : i32
    %c0_i32_0 = arith.constant 0 : i32
    %c0_i32_1 = arith.constant 0 : i32
    return %c0_i32, %c0_i32_0 : i32, i32
  }
  func.func @transform_9(%arg0: i32, %arg1: i32) -> (i32, i32) {
    %c0_i32 = arith.constant 0 : i32
    %c0_i32_0 = arith.constant 0 : i32
    %c0_i32_1 = arith.constant 0 : i32
    return %c0_i32, %c0_i32_0 : i32, i32
  }
  func.func @transform_10(%arg0: i32, %arg1: i32) -> (i32, i32) {
    %c0_i32 = arith.constant 0 : i32
    %c0_i32_0 = arith.constant 0 : i32
    %c0_i32_1 = arith.constant 0 : i32
    return %c0_i32, %c0_i32_0 : i32, i32
  }
}

</mosaic_0001>

<llo_original>
// kernel: tpu_custom_call.1
$region0: #{tpu_custom_call.1}
  #allocation0 [shape = 'u32[]', space=smem, size = 0x4, offset = 0x4, fixed_abs, tag = 'smem constant byte address 0x4 - core index']
  #allocation1 [shape = 'u32[144,128]{1,0:T(1,128)}', space=vmem, size = 0x12000, scoped, tag = 'internal scratch']
  #allocation2 [shape = 'f32[128,128]{1,0:T(8,128)}', space=vmem, size = 0x10000, scoped, tag = 'scratch operand']
  #allocation3 [shape = 'bf16[128,128]{1,0:T(16,128)(2,1)}', space=vmem, size = 0x8000, scoped, tag = 'scratch operand']
  #allocation4 [shape = 'bf16[128,128]{1,0:T(16,128)(2,1)}', space=vmem, size = 0x8000, scoped, tag = 'scratch operand']
  %s0 = inlined_call_operand.hbm [shape: bf16[128,128], index: 0, kind: input, shape index: {}]
  %s1 = inlined_call_operand.hbm [shape: bf16[128,128], index: 1, kind: input, shape index: {}]
  %s2 = inlined_call_operand.hbm [shape: bf16[128,128], index: 2, kind: input, shape index: {}]
  %s3 = inlined_call_operand.hbm [shape: bf16[128,128], index: 3, kind: input, shape index: {}]
  %s4 = inlined_call_operand.vmem [shape: f32[8,128], index: 4, kind: input, shape index: {}]
  %s5 = inlined_call_operand.hbm [shape: bf16[128,128], index: 5, kind: input, shape index: {}]
  %s6 = inlined_call_operand.hbm [shape: bf16[128,128], index: 6, kind: input, shape index: {}]
  %s7 = inlined_call_operand.hbm [shape: bf16[128,128], index: 7, kind: input, shape index: {}]
  %s8 = inlined_call_operand.hbm [shape: bf16[128,128], index: 8, kind: input, shape index: {}]
  %s9 = inlined_call_operand.vmem [shape: f32[1,128], index: 9, kind: input, shape index: {}]
  %s10 = inlined_call_operand.hbm [shape: f32[8,128], index: 10, kind: output, shape index: {}]
  %s11 = sld [smem:[#allocation0]]
  $region121: #{tpu_custom_call.1} parent=0
    _
  %s13 = ssub.s32 1, %s11
  %s14 = scalar_select 0, %s13, %s11
  $region1: #{tpu_custom_call.1} parent=0
    #allocation5 [shape = 'u8[32768]{0}', space=vmem, size = 0x8000, scoped, tag = 'input window, operand 0, single buffered']
    #allocation6 [shape = 's32[2]{0}', space=sflag, size = 0x8, scoped, tag = 'scoped memory for tpu_custom_call.1']
    #allocation7 [shape = 's32[2]{0}', space=sflag, size = 0x8, scoped, tag = 'scoped memory for tpu_custom_call.1']
    #allocation8 [shape = 'u8[32768]{0}', space=vmem, size = 0x8000, scoped, tag = 'input window, operand 1, single buffered']
    #allocation9 [shape = 's32[1]{0}', space=sflag, size = 0x4, scoped, tag = 'scoped memory for tpu_custom_call.1']
    #allocation10 [shape = 'u8[32768]{0}', space=vmem, size = 0x8000, scoped, tag = 'input window, operand 2, single buffered']
    #allocation11 [shape = 'u8[32768]{0}', space=vmem, size = 0x8000, scoped, tag = 'input window, operand 3, single buffered']
    #allocation12 [shape = 's32[1]{0}', space=sflag, size = 0x4, scoped, tag = 'scoped memory for tpu_custom_call.1']
    #allocation13 [shape = 'u8[32768]{0}', space=vmem, size = 0x8000, scoped, tag = 'input window, operand 5, single buffered']
    #allocation14 [shape = 'u8[32768]{0}', space=vmem, size = 0x8000, scoped, tag = 'input window, operand 6, single buffered']
    #allocation15 [shape = 's32[1]{0}', space=sflag, size = 0x4, scoped, tag = 'scoped memory for tpu_custom_call.1']
    #allocation16 [shape = 'u8[32768]{0}', space=vmem, size = 0x8000, scoped, tag = 'input window, operand 7, single buffered']
    #allocation17 [shape = 'u8[32768]{0}', space=vmem, size = 0x8000, scoped, tag = 'input window, operand 8, single buffered']
    #allocation18 [shape = 's32[1]{0}', space=sflag, size = 0x4, scoped, tag = 'scoped memory for tpu_custom_call.1']
    #allocation19 [shape = 'u8[4096]{0}', space=vmem, size = 0x1000, scoped, tag = 'output window, operand 0, single buffered']
    %15 = vsyncpa [#allocation6], 0
    %16 = vsyncpa [#allocation9], 0
    %17 = vsyncpa [#allocation12], 0
    %18 = vsyncpa [#allocation15], 0
    %19 = vsyncpa [#allocation18], 0
    %20 = vsyncpa [#allocation7], 0
    loop: start=0, step=1, limit=5
    $region2: #{tpu_custom_call.1} parent=1 // loop_pre_header
      _
    $region3: #{tpu_custom_call.1} parent=1 // loop_header
      %s22 = sphi 0, %s26
      %p23 = scmp.ge.s32.totalorder %s22, 5
      %s29 = sphi 0, %s41
      %s30 = sphi 0, %s37
      %s31 = sphi 0, %s29
      %s32 = sphi 0, %s30
      %s33 = sphi 0, %s31
      %s34 = sphi 0, %s32
      %s44 = sphi 0, %s46
      %s47 = sphi 0, %s44
      %s48 = sphi 0, %s47
      %s64 = sphi 0, %s48
      %s70 = sphi 0, %s72
      %s73 = sphi 0, %s70
      %s74 = sphi 0, %s73
      %s90 = sphi 0, %s74
      %s94 = sphi 0, %s94
      %s96 = sphi 0, %s94
      %s97 = sphi 0, %s96
      %s111 = sphi 0, %s97
      %s115 = sphi 0, %s115
      %s117 = sphi 0, %s115
      %s118 = sphi 0, %s117
      %s132 = sphi 0, %s118
      %s136 = sphi 0, %s136
      %s138 = sphi 0, %s136
      %s139 = sphi 0, %s138
      %s153 = sphi 0, %s139
      %s157 = sphi 0, %s157
      %s159 = sphi 0, %s157
      %s160 = sphi 0, %s159
      %s174 = sphi 0, %s160
      %s178 = sphi 0, %s178
      %s180 = sphi 0, %s178
      %s181 = sphi 0, %s180
      %s195 = sphi 0, %s181
      %s199 = sphi 0, %s199
      %s201 = sphi 0, %s199
      %s202 = sphi 0, %s201
      %s216 = sphi 0, %s202
      %s220 = sphi 0, %s220
      %s222 = sphi 0, %s220
      %s223 = sphi 0, %s222
      %s237 = sphi 0, %s223
      %s241 = sphi 0, %s241
      %s243 = sphi 0, %s241
      %s244 = sphi 0, %s243
      %s258 = sphi 0, %s244
      %s262 = sphi 0, %s262
      %s264 = sphi 0, %s262
      %s265 = sphi 0, %s264
      %s279 = sphi 0, %s265
    $region4: #{tpu_custom_call.1} parent=1 // loop_header_branch
      %25 = sbr.rel (%p23) target = $region8
    $region5: #{tpu_custom_call.1} parent=1 // loop_body
      %s27 = ssub.s32 %s22, 1
      %s28 = ssub.s32 %s22, 2
      %s35 = sadd.s32 1, %s30
      %p36 = scmp.ge.s32.totalorder %s35, 1
      %s37 = scalar_select %p36, 0, %s35
      %s38 = sadd.s32 1, %s29
      %s39 = scalar_select %p36, %s38, %s29
      %p40 = scmp.ge.s32.totalorder %s39, 3
      %s41 = scalar_select %p40, 0, %s39
      %s42 = ssub.s32 %s30, %s37
      %p43 = scmp.eq.s32.totalorder %s42, 0
      %s45 = sadd.s32 %s44, 1
      %s46 = scalar_select %p43, %s44, %s45
      %p49 = pneg %p43
      %p50 = scmp.eq.s32.totalorder %s22, 2
      %p51 = por %p49, %p50
      %p52 = scmp.ne.s32.totalorder %s44, %s47
      %p53 = scmp.eq.s32.totalorder %s22, 0
      %p54 = por %p52, %p53
      %p55 = scmp.ne.s32.totalorder %s44, %s47
      %p56 = scmp.eq.s32.totalorder %s27, 2
      %p57 = por %p55, %p56
      %p58 = scmp.ne.s32.totalorder %s47, %s48
      %p59 = scmp.eq.s32.totalorder %s27, 0
      %p60 = por %p58, %p59
      %p61 = scmp.ne.s32.totalorder %s47, %s48
      %p62 = scmp.eq.s32.totalorder %s28, 2
      %p63 = por %p61, %p62
      %p65 = scmp.ne.s32.totalorder %s48, %s64
      %p66 = scmp.eq.s32.totalorder %s28, 0
      %p67 = por %p65, %p66
      %s68 = ssub.s32 %s30, %s37
      %p69 = scmp.eq.s32.totalorder %s68, 0
      %s71 = sadd.s32 %s70, 1
      %s72 = scalar_select %p69, %s70, %s71
      %p75 = pneg %p69
      %p76 = scmp.eq.s32.totalorder %s22, 2
      %p77 = por %p75, %p76
      %p78 = scmp.ne.s32.totalorder %s70, %s73
      %p79 = scmp.eq.s32.totalorder %s22, 0
      %p80 = por %p78, %p79
      %p81 = scmp.ne.s32.totalorder %s70, %s73
      %p82 = scmp.eq.s32.totalorder %s27, 2
      %p83 = por %p81, %p82
      %p84 = scmp.ne.s32.totalorder %s73, %s74
      %p85 = scmp.eq.s32.totalorder %s27, 0
      %p86 = por %p84, %p85
      %p87 = scmp.ne.s32.totalorder %s73, %s74
      %p88 = scmp.eq.s32.totalorder %s28, 2
      %p89 = por %p87, %p88
      %p91 = scmp.ne.s32.totalorder %s74, %s90
      %p92 = scmp.eq.s32.totalorder %s28, 0
      %p93 = por %p91, %p92
      %s95 = sadd.s32 %s94, 1
      %p98 = scmp.eq.s32.totalorder %s22, 2
      %p99 = scmp.ne.s32.totalorder %s94, %s96
      %p100 = scmp.eq.s32.totalorder %s22, 0
      %p101 = por %p99, %p100
      %p102 = scmp.ne.s32.totalorder %s94, %s96
      %p103 = scmp.eq.s32.totalorder %s27, 2
      %p104 = por %p102, %p103
      %p105 = scmp.ne.s32.totalorder %s96, %s97
      %p106 = scmp.eq.s32.totalorder %s27, 0
      %p107 = por %p105, %p106
      %p108 = scmp.ne.s32.totalorder %s96, %s97
      %p109 = scmp.eq.s32.totalorder %s28, 2
      %p110 = por %p108, %p109
      %p112 = scmp.ne.s32.totalorder %s97, %s111
      %p113 = scmp.eq.s32.totalorder %s28, 0
      %p114 = por %p112, %p113
      %s116 = sadd.s32 %s115, 1
      %p119 = scmp.eq.s32.totalorder %s22, 2
      %p120 = scmp.ne.s32.totalorder %s115, %s117
      %p121 = scmp.eq.s32.totalorder %s22, 0
      %p122 = por %p120, %p121
      %p123 = scmp.ne.s32.totalorder %s115, %s117
      %p124 = scmp.eq.s32.totalorder %s27, 2
      %p125 = por %p123, %p124
      %p126 = scmp.ne.s32.totalorder %s117, %s118
      %p127 = scmp.eq.s32.totalorder %s27, 0
      %p128 = por %p126, %p127
      %p129 = scmp.ne.s32.totalorder %s117, %s118
      %p130 = scmp.eq.s32.totalorder %s28, 2
      %p131 = por %p129, %p130
      %p133 = scmp.ne.s32.totalorder %s118, %s132
      %p134 = scmp.eq.s32.totalorder %s28, 0
      %p135 = por %p133, %p134
      %s137 = sadd.s32 %s136, 1
      %p140 = scmp.eq.s32.totalorder %s22, 2
      %p141 = scmp.ne.s32.totalorder %s136, %s138
      %p142 = scmp.eq.s32.totalorder %s22, 0
      %p143 = por %p141, %p142
      %p144 = scmp.ne.s32.totalorder %s136, %s138
      %p145 = scmp.eq.s32.totalorder %s27, 2
      %p146 = por %p144, %p145
      %p147 = scmp.ne.s32.totalorder %s138, %s139
      %p148 = scmp.eq.s32.totalorder %s27, 0
      %p149 = por %p147, %p148
      %p150 = scmp.ne.s32.totalorder %s138, %s139
      %p151 = scmp.eq.s32.totalorder %s28, 2
      %p152 = por %p150, %p151
      %p154 = scmp.ne.s32.totalorder %s139, %s153
      %p155 = scmp.eq.s32.totalorder %s28, 0
      %p156 = por %p154, %p155
      %s158 = sadd.s32 %s157, 1
      %p161 = scmp.eq.s32.totalorder %s22, 2
      %p162 = scmp.ne.s32.totalorder %s157, %s159
      %p163 = scmp.eq.s32.totalorder %s22, 0
      %p164 = por %p162, %p163
      %p165 = scmp.ne.s32.totalorder %s157, %s159
      %p166 = scmp.eq.s32.totalorder %s27, 2
      %p167 = por %p165, %p166
      %p168 = scmp.ne.s32.totalorder %s159, %s160
      %p169 = scmp.eq.s32.totalorder %s27, 0
      %p170 = por %p168, %p169
      %p171 = scmp.ne.s32.totalorder %s159, %s160
      %p172 = scmp.eq.s32.totalorder %s28, 2
      %p173 = por %p171, %p172
      %p175 = scmp.ne.s32.totalorder %s160, %s174
      %p176 = scmp.eq.s32.totalorder %s28, 0
      %p177 = por %p175, %p176
      %s179 = sadd.s32 %s178, 1
      %p182 = scmp.eq.s32.totalorder %s22, 2
      %p183 = scmp.ne.s32.totalorder %s178, %s180
      %p184 = scmp.eq.s32.totalorder %s22, 0
      %p185 = por %p183, %p184
      %p186 = scmp.ne.s32.totalorder %s178, %s180
      %p187 = scmp.eq.s32.totalorder %s27, 2
      %p188 = por %p186, %p187
      %p189 = scmp.ne.s32.totalorder %s180, %s181
      %p190 = scmp.eq.s32.totalorder %s27, 0
      %p191 = por %p189, %p190
      %p192 = scmp.ne.s32.totalorder %s180, %s181
      %p193 = scmp.eq.s32.totalorder %s28, 2
      %p194 = por %p192, %p193
      %p196 = scmp.ne.s32.totalorder %s181, %s195
      %p197 = scmp.eq.s32.totalorder %s28, 0
      %p198 = por %p196, %p197
      %s200 = sadd.s32 %s199, 1
      %p203 = scmp.eq.s32.totalorder %s22, 2
      %p204 = scmp.ne.s32.totalorder %s199, %s201
      %p205 = scmp.eq.s32.totalorder %s22, 0
      %p206 = por %p204, %p205
      %p207 = scmp.ne.s32.totalorder %s199, %s201
      %p208 = scmp.eq.s32.totalorder %s27, 2
      %p209 = por %p207, %p208
      %p210 = scmp.ne.s32.totalorder %s201, %s202
      %p211 = scmp.eq.s32.totalorder %s27, 0
      %p212 = por %p210, %p211
      %p213 = scmp.ne.s32.totalorder %s201, %s202
      %p214 = scmp.eq.s32.totalorder %s28, 2
      %p215 = por %p213, %p214
      %p217 = scmp.ne.s32.totalorder %s202, %s216
      %p218 = scmp.eq.s32.totalorder %s28, 0
      %p219 = por %p217, %p218
      %s221 = sadd.s32 %s220, 1
      %p224 = scmp.eq.s32.totalorder %s22, 2
      %p225 = scmp.ne.s32.totalorder %s220, %s222
      %p226 = scmp.eq.s32.totalorder %s22, 0
      %p227 = por %p225, %p226
      %p228 = scmp.ne.s32.totalorder %s220, %s222
      %p229 = scmp.eq.s32.totalorder %s27, 2
      %p230 = por %p228, %p229
      %p231 = scmp.ne.s32.totalorder %s222, %s223
      %p232 = scmp.eq.s32.totalorder %s27, 0
      %p233 = por %p231, %p232
      %p234 = scmp.ne.s32.totalorder %s222, %s223
      %p235 = scmp.eq.s32.totalorder %s28, 2
      %p236 = por %p234, %p235
      %p238 = scmp.ne.s32.totalorder %s223, %s237
      %p239 = scmp.eq.s32.totalorder %s28, 0
      %p240 = por %p238, %p239
      %s242 = sadd.s32 %s241, 1
      %p245 = scmp.eq.s32.totalorder %s22, 2
      %p246 = scmp.ne.s32.totalorder %s241, %s243
      %p247 = scmp.eq.s32.totalorder %s22, 0
      %p248 = por %p246, %p247
      %p249 = scmp.ne.s32.totalorder %s241, %s243
      %p250 = scmp.eq.s32.totalorder %s27, 2
      %p251 = por %p249, %p250
      %p252 = scmp.ne.s32.totalorder %s243, %s244
      %p253 = scmp.eq.s32.totalorder %s27, 0
      %p254 = por %p252, %p253
      %p255 = scmp.ne.s32.totalorder %s243, %s244
      %p256 = scmp.eq.s32.totalorder %s28, 2
      %p257 = por %p255, %p256
      %p259 = scmp.ne.s32.totalorder %s244, %s258
      %p260 = scmp.eq.s32.totalorder %s28, 0
      %p261 = por %p259, %p260
      %s263 = sadd.s32 %s262, 1
      %p266 = scmp.eq.s32.totalorder %s22, 2
      %p267 = scmp.ne.s32.totalorder %s262, %s264
      %p268 = scmp.eq.s32.totalorder %s22, 0
      %p269 = por %p267, %p268
      %p270 = scmp.ne.s32.totalorder %s262, %s264
      %p271 = scmp.eq.s32.totalorder %s27, 2
      %p272 = por %p270, %p271
      %p273 = scmp.ne.s32.totalorder %s264, %s265
      %p274 = scmp.eq.s32.totalorder %s27, 0
      %p275 = por %p273, %p274
      %p276 = scmp.ne.s32.totalorder %s264, %s265
      %p277 = scmp.eq.s32.totalorder %s28, 2
      %p278 = por %p276, %p277
      %p280 = scmp.ne.s32.totalorder %s265, %s279
      %p281 = scmp.eq.s32.totalorder %s28, 0
      %p282 = por %p280, %p281
      %p283 = scmp.le.s32.totalorder 1, %s22
      %p284 = scmp.lt.s32.totalorder %s22, 4
      %p285 = pnand %p283, %p284
      %p286 = pneg %p285
      // Predicated region
      $region9: #{tpu_custom_call.1} parent=5 // pred_check
        _
      $region10: #{tpu_custom_call.1} parent=5 // pred_check_branch
        %288 = sbr.rel (%p285) target = $region12
      $region11: #{tpu_custom_call.1} parent=5 // pred_region
        %s289 = ssub.s32 %s22, 1
        // Predicated region
        $region13: #{tpu_custom_call.1} parent=11 // pred_check
          %p290 = pneg %p60
        $region14: #{tpu_custom_call.1} parent=11 // pred_check_branch
          %292 = sbr.rel (%p290) target = $region16
        $region15: #{tpu_custom_call.1} parent=11 // pred_region
          %s293 = smul.u32 16, %s32
          %s295 = ssub.s32 1024, 1024
          %296 = vsyncadd [#allocation6], %s295
          %s297 = smul.addr %s293, 64
          %s298 = scalar_lea.hbm %s0, %s297
          %s299 = sshll.u32 [#allocation5], 4
          %s300 = int_to_ptr.vmem [resolvable:$true] %s299
          %305 = dma.hbm_to_vmem [thread:$0]  %s298, 1024, %s300, [#allocation6], 64, 64, 4
        $region16: #{tpu_custom_call.1} parent=11 // pred_fallthru
          _
        // Predicated region
        $region17: #{tpu_custom_call.1} parent=11 // pred_check
          %p306 = pneg %p86
        $region18: #{tpu_custom_call.1} parent=11 // pred_check_branch
          %308 = sbr.rel (%p306) target = $region20
        $region19: #{tpu_custom_call.1} parent=11 // pred_region
          %s309 = smul.u32 16, %s32
          %s311 = ssub.s32 1024, 1024
          %312 = vsyncadd [#allocation9], %s311
          %s313 = smul.addr %s309, 64
          %s314 = scalar_lea.hbm %s1, %s313
          %s315 = sshll.u32 [#allocation8], 4
          %s316 = int_to_ptr.vmem [resolvable:$true] %s315
          %321 = dma.hbm_to_vmem [thread:$0]  %s314, 1024, %s316, [#allocation9], 64, 64, 4
        $region20: #{tpu_custom_call.1} parent=11 // pred_fallthru
          _
        // Predicated region
        $region21: #{tpu_custom_call.1} parent=11 // pred_check
          %p322 = pneg %p107
        $region22: #{tpu_custom_call.1} parent=11 // pred_check_branch
          %324 = sbr.rel (%p322) target = $region24
        $region23: #{tpu_custom_call.1} parent=11 // pred_region
          %s326 = ssub.s32 1024, 1024
          %327 = vsyncadd [#allocation9], %s326
          %s328 = sshll.u32 [#allocation10], 4
          %s329 = int_to_ptr.vmem [resolvable:$true] %s328
          %334 = dma.hbm_to_vmem [thread:$0]  %s2, 1024, %s329, [#allocation9], 64, 64, 4
        $region24: #{tpu_custom_call.1} parent=11 // pred_fallthru
          _
        // Predicated region
        $region25: #{tpu_custom_call.1} parent=11 // pred_check
          %p335 = pneg %p128
        $region26: #{tpu_custom_call.1} parent=11 // pred_check_branch
          %337 = sbr.rel (%p335) target = $region28
        $region27: #{tpu_custom_call.1} parent=11 // pred_region
          %s339 = ssub.s32 1024, 1024
          %340 = vsyncadd [#allocation12], %s339
          %s341 = sshll.u32 [#allocation11], 4
          %s342 = int_to_ptr.vmem [resolvable:$true] %s341
          %347 = dma.hbm_to_vmem [thread:$0]  %s3, 1024, %s342, [#allocation12], 64, 64, 4
        $region28: #{tpu_custom_call.1} parent=11 // pred_fallthru
          _
        // Predicated region
        $region29: #{tpu_custom_call.1} parent=11 // pred_check
          %p348 = pneg %p149
        $region30: #{tpu_custom_call.1} parent=11 // pred_check_branch
          %350 = sbr.rel (%p348) target = $region32
        $region31: #{tpu_custom_call.1} parent=11 // pred_region
          _
        $region32: #{tpu_custom_call.1} parent=11 // pred_fallthru
          _
        // Predicated region
        $region33: #{tpu_custom_call.1} parent=11 // pred_check
          %p351 = pneg %p170
        $region34: #{tpu_custom_call.1} parent=11 // pred_check_branch
          %353 = sbr.rel (%p351) target = $region36
        $region35: #{tpu_custom_call.1} parent=11 // pred_region
          %s355 = ssub.s32 1024, 1024
          %356 = vsyncadd [#allocation12], %s355
          %s357 = sshll.u32 [#allocation13], 4
          %s358 = int_to_ptr.vmem [resolvable:$true] %s357
          %363 = dma.hbm_to_vmem [thread:$0]  %s5, 1024, %s358, [#allocation12], 64, 64, 4
        $region36: #{tpu_custom_call.1} parent=11 // pred_fallthru
          _
        // Predicated region
        $region37: #{tpu_custom_call.1} parent=11 // pred_check
          %p364 = pneg %p191
        $region38: #{tpu_custom_call.1} parent=11 // pred_check_branch
          %366 = sbr.rel (%p364) target = $region40
        $region39: #{tpu_custom_call.1} parent=11 // pred_region
          %s368 = ssub.s32 1024, 1024
          %369 = vsyncadd [#allocation15], %s368
          %s370 = sshll.u32 [#allocation14], 4
          %s371 = int_to_ptr.vmem [resolvable:$true] %s370
          %376 = dma.hbm_to_vmem [thread:$0]  %s6, 1024, %s371, [#allocation15], 64, 64, 4
        $region40: #{tpu_custom_call.1} parent=11 // pred_fallthru
          _
        // Predicated region
        $region41: #{tpu_custom_call.1} parent=11 // pred_check
          %p377 = pneg %p212
        $region42: #{tpu_custom_call.1} parent=11 // pred_check_branch
          %379 = sbr.rel (%p377) target = $region44
        $region43: #{tpu_custom_call.1} parent=11 // pred_region
          %s381 = ssub.s32 1024, 1024
          %382 = vsyncadd [#allocation15], %s381
          %s383 = sshll.u32 [#allocation16], 4
          %s384 = int_to_ptr.vmem [resolvable:$true] %s383
          %389 = dma.hbm_to_vmem [thread:$0]  %s7, 1024, %s384, [#allocation15], 64, 64, 4
        $region44: #{tpu_custom_call.1} parent=11 // pred_fallthru
          _
        // Predicated region
        $region45: #{tpu_custom_call.1} parent=11 // pred_check
          %p390 = pneg %p233
        $region46: #{tpu_custom_call.1} parent=11 // pred_check_branch
          %392 = sbr.rel (%p390) target = $region48
        $region47: #{tpu_custom_call.1} parent=11 // pred_region
          %s394 = ssub.s32 1024, 1024
          %395 = vsyncadd [#allocation18], %s394
          %s396 = sshll.u32 [#allocation17], 4
          %s397 = int_to_ptr.vmem [resolvable:$true] %s396
          %402 = dma.hbm_to_vmem [thread:$0]  %s8, 1024, %s397, [#allocation18], 64, 64, 4
        $region48: #{tpu_custom_call.1} parent=11 // pred_fallthru
          _
        // Predicated region
        $region49: #{tpu_custom_call.1} parent=11 // pred_check
          %p403 = pneg %p254
        $region50: #{tpu_custom_call.1} parent=11 // pred_check_branch
          %405 = sbr.rel (%p403) target = $region52
        $region51: #{tpu_custom_call.1} parent=11 // pred_region
          _
        $region52: #{tpu_custom_call.1} parent=11 // pred_fallthru
          _
      $region12: #{tpu_custom_call.1} parent=5 // pred_fallthru
        _
      %p406 = scmp.lt.s32.totalorder %s22, 3
      // Predicated region
      $region53: #{tpu_custom_call.1} parent=5 // pred_check
        %p407 = pneg %p406
      $region54: #{tpu_custom_call.1} parent=5 // pred_check_branch
        %409 = sbr.rel (%p407) target = $region56
      $region55: #{tpu_custom_call.1} parent=5 // pred_region
        _
      $region56: #{tpu_custom_call.1} parent=5 // pred_fallthru
        _
      %p410 = scmp.le.s32.totalorder 1, %s22
      %p411 = scmp.lt.s32.totalorder %s22, 4
      %p412 = pnand %p410, %p411
      %p413 = pneg %p412
      // Predicated region
      $region57: #{tpu_custom_call.1} parent=5 // pred_check
        _
      $region58: #{tpu_custom_call.1} parent=5 // pred_check_branch
        %415 = sbr.rel (%p412) target = $region60
      $region59: #{tpu_custom_call.1} parent=5 // pred_region
        %s416 = ssub.s32 %s22, 1
        // Predicated region
        $region61: #{tpu_custom_call.1} parent=59 // pred_check
          %p417 = pneg %p60
        $region62: #{tpu_custom_call.1} parent=59 // pred_check_branch
          %419 = sbr.rel (%p417) target = $region64
        $region63: #{tpu_custom_call.1} parent=59 // pred_region
          %420 = dma.done [#allocation6], 1024
        $region64: #{tpu_custom_call.1} parent=59 // pred_fallthru
          _
        // Predicated region
        $region65: #{tpu_custom_call.1} parent=59 // pred_check
          %p421 = pneg %p86
        $region66: #{tpu_custom_call.1} parent=59 // pred_check_branch
          %423 = sbr.rel (%p421) target = $region68
        $region67: #{tpu_custom_call.1} parent=59 // pred_region
          %424 = dma.done [#allocation9], 1024
        $region68: #{tpu_custom_call.1} parent=59 // pred_fallthru
          _
        // Predicated region
        $region69: #{tpu_custom_call.1} parent=59 // pred_check
          %p425 = pneg %p107
        $region70: #{tpu_custom_call.1} parent=59 // pred_check_branch
          %427 = sbr.rel (%p425) target = $region72
        $region71: #{tpu_custom_call.1} parent=59 // pred_region
          %428 = dma.done [#allocation9], 1024
        $region72: #{tpu_custom_call.1} parent=59 // pred_fallthru
          _
        // Predicated region
        $region73: #{tpu_custom_call.1} parent=59 // pred_check
          %p429 = pneg %p128
        $region74: #{tpu_custom_call.1} parent=59 // pred_check_branch
          %431 = sbr.rel (%p429) target = $region76
        $region75: #{tpu_custom_call.1} parent=59 // pred_region
          %432 = dma.done [#allocation12], 1024
        $region76: #{tpu_custom_call.1} parent=59 // pred_fallthru
          _
        // Predicated region
        $region77: #{tpu_custom_call.1} parent=59 // pred_check
          %p433 = pneg %p170
        $region78: #{tpu_custom_call.1} parent=59 // pred_check_branch
          %435 = sbr.rel (%p433) target = $region80
        $region79: #{tpu_custom_call.1} parent=59 // pred_region
          %436 = dma.done [#allocation12], 1024
        $region80: #{tpu_custom_call.1} parent=59 // pred_fallthru
          _
        // Predicated region
        $region81: #{tpu_custom_call.1} parent=59 // pred_check
          %p437 = pneg %p191
        $region82: #{tpu_custom_call.1} parent=59 // pred_check_branch
          %439 = sbr.rel (%p437) target = $region84
        $region83: #{tpu_custom_call.1} parent=59 // pred_region
          %440 = dma.done [#allocation15], 1024
        $region84: #{tpu_custom_call.1} parent=59 // pred_fallthru
          _
        // Predicated region
        $region85: #{tpu_custom_call.1} parent=59 // pred_check
          %p441 = pneg %p212
        $region86: #{tpu_custom_call.1} parent=59 // pred_check_branch
          %443 = sbr.rel (%p441) target = $region88
        $region87: #{tpu_custom_call.1} parent=59 // pred_region
          %444 = dma.done [#allocation15], 1024
        $region88: #{tpu_custom_call.1} parent=59 // pred_fallthru
          _
        // Predicated region
        $region89: #{tpu_custom_call.1} parent=59 // pred_check
          %p445 = pneg %p233
        $region90: #{tpu_custom_call.1} parent=59 // pred_check_branch
          %447 = sbr.rel (%p445) target = $region92
        $region91: #{tpu_custom_call.1} parent=59 // pred_region
          %448 = dma.done [#allocation18], 1024
        $region92: #{tpu_custom_call.1} parent=59 // pred_fallthru
          _
        %p449 = pneg %p60
        %p450 = pneg %p57
        %p451 = pneg %p86
        %p452 = pneg %p83
        %p453 = pneg %p107
        %p454 = pneg %p104
        %p455 = pneg %p128
        %p456 = pneg %p125
        %p457 = pneg %p149
        %p458 = pneg %p146
        %p459 = pneg %p170
        %p460 = pneg %p167
        %p461 = pneg %p191
        %p462 = pneg %p188
        %p463 = pneg %p212
        %p464 = pneg %p209
        %p465 = pneg %p233
        %p466 = pneg %p230
        %p467 = pneg %p254
        %p468 = pneg %p251
        %p469 = pneg %p275
        %p470 = pneg %p272
        %s471 = smul.u32 16, %s32
        %s472 = smul.u32 16, %s32
        %s474 = smul.u32 %s32, 128
        %p475 = scmp.eq.s32.totalorder %s31, 0
        // Predicated region
        $region93: #{tpu_custom_call.1} parent=59 // pred_check
          %p476 = pneg %p475
        $region94: #{tpu_custom_call.1} parent=59 // pred_check_branch
          %478 = sbr.rel (%p476) target = $region96
        $region95: #{tpu_custom_call.1} parent=59 // pred_region
          %v479 = vld [vmem:[#allocation5] sm:$0xf]
          %v480 = vld [vmem:[#allocation5 + $0x4] sm:$0xf]
          %v481 = vld [vmem:[#allocation5 + $0x8] sm:$0xf]
          %v482 = vld [vmem:[#allocation5 + $0xc] sm:$0xf]
          %v483 = vld [vmem:[#allocation5 + $0x10] sm:$0xf]
          %v484 = vld [vmem:[#allocation5 + $0x14] sm:$0xf]
          %v485 = vld [vmem:[#allocation5 + $0x18] sm:$0xf]
          %v486 = vld [vmem:[#allocation5 + $0x1c] sm:$0xf]
          %v487 = vld [vmem:[#allocation5 + $0x20] sm:$0xf]
          %v488 = vld [vmem:[#allocation5 + $0x24] sm:$0xf]
          %v489 = vld [vmem:[#allocation5 + $0x28] sm:$0xf]
          %v490 = vld [vmem:[#allocation5 + $0x2c] sm:$0xf]
          %v491 = vld [vmem:[#allocation5 + $0x30] sm:$0xf]
          %v492 = vld [vmem:[#allocation5 + $0x34] sm:$0xf]
          %v493 = vld [vmem:[#allocation5 + $0x38] sm:$0xf]
          %v494 = vld [vmem:[#allocation5 + $0x3c] sm:$0xf]
          %v495 = vld [vmem:[#allocation13] sm:$0xf]
          %v496 = vld [vmem:[#allocation13 + $0x4] sm:$0xf]
          %v497 = vld [vmem:[#allocation13 + $0x8] sm:$0xf]
          %v498 = vld [vmem:[#allocation13 + $0xc] sm:$0xf]
          %v499 = vld [vmem:[#allocation13 + $0x10] sm:$0xf]
          %v500 = vld [vmem:[#allocation13 + $0x14] sm:$0xf]
          %v501 = vld [vmem:[#allocation13 + $0x18] sm:$0xf]
          %v502 = vld [vmem:[#allocation13 + $0x1c] sm:$0xf]
          %v503 = vld [vmem:[#allocation13 + $0x20] sm:$0xf]
          %v504 = vld [vmem:[#allocation13 + $0x24] sm:$0xf]
          %v505 = vld [vmem:[#allocation13 + $0x28] sm:$0xf]
          %v506 = vld [vmem:[#allocation13 + $0x2c] sm:$0xf]
          %v507 = vld [vmem:[#allocation13 + $0x30] sm:$0xf]
          %v508 = vld [vmem:[#allocation13 + $0x34] sm:$0xf]
          %v509 = vld [vmem:[#allocation13 + $0x38] sm:$0xf]
          %v510 = vld [vmem:[#allocation13 + $0x3c] sm:$0xf]
          %v527 = vunpack.c.l.b16 %v479
          %v528 = vunpack.c.l.b16 %v480
          %v529 = vunpack.c.l.b16 %v481
          %v530 = vunpack.c.l.b16 %v482
          %v531 = vunpack.c.l.b16 %v483
          %v532 = vunpack.c.l.b16 %v484
          %v533 = vunpack.c.l.b16 %v485
          %v534 = vunpack.c.l.b16 %v486
          %v535 = vunpack.c.l.b16 %v487
          %v536 = vunpack.c.l.b16 %v488
          %v537 = vunpack.c.l.b16 %v489
          %v538 = vunpack.c.l.b16 %v490
          %v539 = vunpack.c.l.b16 %v491
          %v540 = vunpack.c.l.b16 %v492
          %v541 = vunpack.c.l.b16 %v493
          %v542 = vunpack.c.l.b16 %v494
          %v543 = vpack.c.b16 %v528, %v527
          %v544 = vpack.c.b16 %v530, %v529
          %v545 = vpack.c.b16 %v532, %v531
          %v546 = vpack.c.b16 %v534, %v533
          %v547 = vpack.c.b16 %v536, %v535
          %v548 = vpack.c.b16 %v538, %v537
          %v549 = vpack.c.b16 %v540, %v539
          %v550 = vpack.c.b16 %v542, %v541
          %v575 = vunpack.c.l.b16 %v495
          %v576 = vunpack.c.l.b16 %v496
          %v577 = vunpack.c.l.b16 %v497
          %v578 = vunpack.c.l.b16 %v498
          %v579 = vunpack.c.l.b16 %v499
          %v580 = vunpack.c.l.b16 %v500
          %v581 = vunpack.c.l.b16 %v501
          %v582 = vunpack.c.l.b16 %v502
          %v583 = vunpack.c.l.b16 %v503
          %v584 = vunpack.c.l.b16 %v504
          %v585 = vunpack.c.l.b16 %v505
          %v586 = vunpack.c.l.b16 %v506
          %v587 = vunpack.c.l.b16 %v507
          %v588 = vunpack.c.l.b16 %v508
          %v589 = vunpack.c.l.b16 %v509
          %v590 = vunpack.c.l.b16 %v510
          %v591 = vpack.c.b16 %v576, %v575
          %v592 = vpack.c.b16 %v578, %v577
          %v593 = vpack.c.b16 %v580, %v579
          %v594 = vpack.c.b16 %v582, %v581
          %v595 = vpack.c.b16 %v584, %v583
          %v596 = vpack.c.b16 %v586, %v585
          %v597 = vpack.c.b16 %v588, %v587
          %v598 = vpack.c.b16 %v590, %v589
          %607 = vmatprep.subr.bf16.mxu0 0
          %608 = vmatpush1.bf16.msra.mxu0 %v591
          %609 = vmatprep.subr.bf16.mxu0 0
          %610 = vmatpush1.bf16.msra.mxu0 %v592
          %611 = vmatprep.subr.bf16.mxu0 0
          %612 = vmatpush1.bf16.msra.mxu0 %v593
          %613 = vmatprep.subr.bf16.mxu0 0
          %614 = vmatpush1.bf16.msra.mxu0 %v594
          %615 = vmatprep.subr.bf16.mxu0 0
          %616 = vmatpush1.bf16.msra.mxu0 %v595
          %617 = vmatprep.subr.bf16.mxu0 0
          %618 = vmatpush1.bf16.msra.mxu0 %v596
          %619 = vmatprep.subr.bf16.mxu0 0
          %620 = vmatpush1.bf16.msra.mxu0 %v597
          %621 = vmatprep.subr.bf16.mxu0 0
          %622 = vmatpush1.bf16.msra.mxu0 %v598
          %623 = vmatprep.subr.bf16.mxu0 0
          %624 = vmatpush1.bf16.msra.mxu0 0
          %625 = vmatprep.subr.bf16.mxu0 0
          %626 = vmatpush1.bf16.msra.mxu0 0
          %627 = vmatprep.subr.bf16.mxu0 0
          %628 = vmatpush1.bf16.msra.mxu0 0
          %629 = vmatprep.subr.bf16.mxu0 0
          %630 = vmatpush1.bf16.msra.mxu0 0
          %631 = vmatprep.subr.bf16.mxu0 0
          %632 = vmatpush1.bf16.msra.mxu0 0
          %633 = vmatprep.subr.bf16.mxu0 0
          %634 = vmatpush1.bf16.msra.mxu0 0
          %635 = vmatprep.subr.bf16.mxu0 0
          %636 = vmatpush1.bf16.msra.mxu0 0
          %637 = vmatprep.subr.bf16.mxu0 0
          %638 = vmatpush1.bf16.msra.mxu0 0
          %639 = vmatprep.mubr.bf16.mxu0 0
          %640 = vmatmul.mubr.bf16.gmra.mrb[0].mxu0 %v543
          %v641 = vpop.f32.mrb[0].mxu0
          %v642 = vadd.f32 0.0, %v641
          %v643 = vpop.f32.mrb[0].mxu0
          %v644 = vpop.f32.mrb[0].mxu0
          %v645 = vadd.f32 0.0, %v644
          %v646 = vpop.f32.mrb[0].mxu0
          %647 = vmatprep.mubr.bf16.mxu0 0
          %648 = vmatmul.mubr.bf16.gmra.mrb[0].mxu0 %v544
          %v649 = vpop.f32.mrb[0].mxu0
          %v650 = vadd.f32 0.0, %v649
          %v651 = vpop.f32.mrb[0].mxu0
          %v652 = vpop.f32.mrb[0].mxu0
          %v653 = vadd.f32 0.0, %v652
          %v654 = vpop.f32.mrb[0].mxu0
          %655 = vmatprep.mubr.bf16.mxu0 0
          %656 = vmatmul.mubr.bf16.gmra.mrb[0].mxu0 %v545
          %v657 = vpop.f32.mrb[0].mxu0
          %v658 = vadd.f32 0.0, %v657
          %v659 = vpop.f32.mrb[0].mxu0
          %v660 = vpop.f32.mrb[0].mxu0
          %v661 = vadd.f32 0.0, %v660
          %v662 = vpop.f32.mrb[0].mxu0
          %663 = vmatprep.mubr.bf16.mxu0 0
          %664 = vmatmul.mubr.bf16.gmra.mrb[0].mxu0 %v546
          %v665 = vpop.f32.mrb[0].mxu0
          %v666 = vadd.f32 0.0, %v665
          %v667 = vpop.f32.mrb[0].mxu0
          %v668 = vpop.f32.mrb[0].mxu0
          %v669 = vadd.f32 0.0, %v668
          %v670 = vpop.f32.mrb[0].mxu0
          %671 = vmatprep.mubr.bf16.mxu0 0
          %672 = vmatmul.mubr.bf16.gmra.mrb[0].mxu0 %v547
          %v673 = vpop.f32.mrb[0].mxu0
          %v674 = vadd.f32 0.0, %v673
          %v675 = vpop.f32.mrb[0].mxu0
          %v676 = vpop.f32.mrb[0].mxu0
          %v677 = vadd.f32 0.0, %v676
          %v678 = vpop.f32.mrb[0].mxu0
          %679 = vmatprep.mubr.bf16.mxu0 0
          %680 = vmatmul.mubr.bf16.gmra.mrb[0].mxu0 %v548
          %v681 = vpop.f32.mrb[0].mxu0
          %v682 = vadd.f32 0.0, %v681
          %v683 = vpop.f32.mrb[0].mxu0
          %v684 = vpop.f32.mrb[0].mxu0
          %v685 = vadd.f32 0.0, %v684
          %v686 = vpop.f32.mrb[0].mxu0
          %687 = vmatprep.mubr.bf16.mxu0 0
          %688 = vmatmul.mubr.bf16.gmra.mrb[0].mxu0 %v549
          %v689 = vpop.f32.mrb[0].mxu0
          %v690 = vadd.f32 0.0, %v689
          %v691 = vpop.f32.mrb[0].mxu0
          %v692 = vpop.f32.mrb[0].mxu0
          %v693 = vadd.f32 0.0, %v692
          %v694 = vpop.f32.mrb[0].mxu0
          %695 = vmatprep.mubr.bf16.mxu0 0
          %696 = vmatmul.mubr.bf16.gmra.mrb[0].mxu0 %v550
          %v697 = vpop.f32.mrb[0].mxu0
          %v698 = vadd.f32 0.0, %v697
          %v699 = vpop.f32.mrb[0].mxu0
          %v700 = vpop.f32.mrb[0].mxu0
          %v701 = vadd.f32 0.0, %v700
          %v702 = vpop.f32.mrb[0].mxu0
          %703 = vdwg.mxu0
          %s704 = scalar_lea.vmem [#allocation2], %s474
          %705 = vst [vmem:[%s704] sm:$0xff] %v642
          %706 = vst [vmem:[%s704 + $0x8] sm:$0xff] %v645
          %707 = vst [vmem:[%s704 + $0x10] sm:$0xff] %v650
          %708 = vst [vmem:[%s704 + $0x18] sm:$0xff] %v653
          %709 = vst [vmem:[%s704 + $0x20] sm:$0xff] %v658
          %710 = vst [vmem:[%s704 + $0x28] sm:$0xff] %v661
          %711 = vst [vmem:[%s704 + $0x30] sm:$0xff] %v666
          %712 = vst [vmem:[%s704 + $0x38] sm:$0xff] %v669
          %713 = vst [vmem:[%s704 + $0x40] sm:$0xff] %v674
          %714 = vst [vmem:[%s704 + $0x48] sm:$0xff] %v677
          %715 = vst [vmem:[%s704 + $0x50] sm:$0xff] %v682
          %716 = vst [vmem:[%s704 + $0x58] sm:$0xff] %v685
          %717 = vst [vmem:[%s704 + $0x60] sm:$0xff] %v690
          %718 = vst [vmem:[%s704 + $0x68] sm:$0xff] %v693
          %719 = vst [vmem:[%s704 + $0x70] sm:$0xff] %v698
          %720 = vst [vmem:[%s704 + $0x78] sm:$0xff] %v701
          %v721 = vmax.f32 %v642, 0.0
          %v722 = vmax.f32 %v645, 0.0
          %v723 = vmax.f32 %v650, 0.0
          %v724 = vmax.f32 %v653, 0.0
          %v725 = vmax.f32 %v658, 0.0
          %v726 = vmax.f32 %v661, 0.0
          %v727 = vmax.f32 %v666, 0.0
          %v728 = vmax.f32 %v669, 0.0
          %v729 = vmax.f32 %v674, 0.0
          %v730 = vmax.f32 %v677, 0.0
          %v731 = vmax.f32 %v682, 0.0
          %v732 = vmax.f32 %v685, 0.0
          %v733 = vmax.f32 %v690, 0.0
          %v734 = vmax.f32 %v693, 0.0
          %v735 = vmax.f32 %v698, 0.0
          %v736 = vmax.f32 %v701, 0.0
          %v737 = vpack.c.bf16 %v722, %v721
          %v738 = vpack.c.bf16 %v724, %v723
          %v739 = vpack.c.bf16 %v726, %v725
          %v740 = vpack.c.bf16 %v728, %v727
          %v741 = vpack.c.bf16 %v730, %v729
          %v742 = vpack.c.bf16 %v732, %v731
          %v743 = vpack.c.bf16 %v734, %v733
          %v744 = vpack.c.bf16 %v736, %v735
          %s745 = sshra.s32 %s474, 4
          %s746 = sand.u32 %s474, 15
          %s747 = smul.addr %s745, 8
          %s748 = scalar_lea.vmem [#allocation3], %s747
          %749 = vst [vmem:[%s748] sm:$0xff] %v737
          %750 = vst [vmem:[%s748 + $0x8] sm:$0xff] %v738
          %751 = vst [vmem:[%s748 + $0x10] sm:$0xff] %v739
          %752 = vst [vmem:[%s748 + $0x18] sm:$0xff] %v740
          %753 = vst [vmem:[%s748 + $0x20] sm:$0xff] %v741
          %754 = vst [vmem:[%s748 + $0x28] sm:$0xff] %v742
          %755 = vst [vmem:[%s748 + $0x30] sm:$0xff] %v743
          %756 = vst [vmem:[%s748 + $0x38] sm:$0xff] %v744
        $region96: #{tpu_custom_call.1} parent=59 // pred_fallthru
          _
        %p757 = scmp.ge.s32.totalorder %s31, 2
        %p758 = scmp.eq.s32.totalorder %s32, 0
        %p759 = pnand %p757, %p758
        %p760 = pneg %p759
        // Predicated region
        $region97: #{tpu_custom_call.1} parent=59 // pred_check
          _
        $region98: #{tpu_custom_call.1} parent=59 // pred_check_branch
          %762 = sbr.rel (%p759) target = $region100
        $region99: #{tpu_custom_call.1} parent=59 // pred_region
          %v763 = vld [vmem:[#allocation4] sm:$0xff]
          %v764 = vld [vmem:[#allocation4 + $0x8] sm:$0xff]
          %v765 = vld [vmem:[#allocation4 + $0x10] sm:$0xff]
          %v766 = vld [vmem:[#allocation4 + $0x18] sm:$0xff]
          %v767 = vld [vmem:[#allocation4 + $0x20] sm:$0xff]
          %v768 = vld [vmem:[#allocation4 + $0x28] sm:$0xff]
          %v769 = vld [vmem:[#allocation4 + $0x30] sm:$0xff]
          %v770 = vld [vmem:[#allocation4 + $0x38] sm:$0xff]
          %771 = vst [vmem:[#allocation3] sm:$0xff] %v763
          %772 = vst [vmem:[#allocation3 + $0x8] sm:$0xff] %v764
          %773 = vst [vmem:[#allocation3 + $0x10] sm:$0xff] %v765
          %774 = vst [vmem:[#allocation3 + $0x18] sm:$0xff] %v766
          %775 = vst [vmem:[#allocation3 + $0x20] sm:$0xff] %v767
          %776 = vst [vmem:[#allocation3 + $0x28] sm:$0xff] %v768
          %777 = vst [vmem:[#allocation3 + $0x30] sm:$0xff] %v769
          %778 = vst [vmem:[#allocation3 + $0x38] sm:$0xff] %v770
        $region100: #{tpu_custom_call.1} parent=59 // pred_fallthru
          _
        %p779 = scmp.gt.s32.totalorder %s31, 0
        // Predicated region
        $region101: #{tpu_custom_call.1} parent=59 // pred_check
          %p780 = pneg %p779
        $region102: #{tpu_custom_call.1} parent=59 // pred_check_branch
          %782 = sbr.rel (%p780) target = $region104
        $region103: #{tpu_custom_call.1} parent=59 // pred_region
          %v783 = vld [vmem:[#allocation8] sm:$0xf]
          %v784 = vld [vmem:[#allocation8 + $0x4] sm:$0xf]
          %v785 = vld [vmem:[#allocation8 + $0x8] sm:$0xf]
          %v786 = vld [vmem:[#allocation8 + $0xc] sm:$0xf]
          %v787 = vld [vmem:[#allocation8 + $0x10] sm:$0xf]
          %v788 = vld [vmem:[#allocation8 + $0x14] sm:$0xf]
          %v789 = vld [vmem:[#allocation8 + $0x18] sm:$0xf]
          %v790 = vld [vmem:[#allocation8 + $0x1c] sm:$0xf]
          %v791 = vld [vmem:[#allocation8 + $0x20] sm:$0xf]
          %v792 = vld [vmem:[#allocation8 + $0x24] sm:$0xf]
          %v793 = vld [vmem:[#allocation8 + $0x28] sm:$0xf]
          %v794 = vld [vmem:[#allocation8 + $0x2c] sm:$0xf]
          %v795 = vld [vmem:[#allocation8 + $0x30] sm:$0xf]
          %v796 = vld [vmem:[#allocation8 + $0x34] sm:$0xf]
          %v797 = vld [vmem:[#allocation8 + $0x38] sm:$0xf]
          %v798 = vld [vmem:[#allocation8 + $0x3c] sm:$0xf]
          %v799 = vld [vmem:[#allocation3] sm:$0xff]
          %v800 = vld [vmem:[#allocation3 + $0x8] sm:$0xff]
          %v801 = vld [vmem:[#allocation3 + $0x10] sm:$0xff]
          %v802 = vld [vmem:[#allocation3 + $0x18] sm:$0xff]
          %v803 = vld [vmem:[#allocation3 + $0x20] sm:$0xff]
          %v804 = vld [vmem:[#allocation3 + $0x28] sm:$0xff]
          %v805 = vld [vmem:[#allocation3 + $0x30] sm:$0xff]
          %v806 = vld [vmem:[#allocation3 + $0x38] sm:$0xff]
          %v823 = vunpack.c.l.b16 %v783
          %v824 = vunpack.c.l.b16 %v784
          %v825 = vunpack.c.l.b16 %v785
          %v826 = vunpack.c.l.b16 %v786
          %v827 = vunpack.c.l.b16 %v787
          %v828 = vunpack.c.l.b16 %v788
          %v829 = vunpack.c.l.b16 %v789
          %v830 = vunpack.c.l.b16 %v790
          %v831 = vunpack.c.l.b16 %v791
          %v832 = vunpack.c.l.b16 %v792
          %v833 = vunpack.c.l.b16 %v793
          %v834 = vunpack.c.l.b16 %v794
          %v835 = vunpack.c.l.b16 %v795
          %v836 = vunpack.c.l.b16 %v796
          %v837 = vunpack.c.l.b16 %v797
          %v838 = vunpack.c.l.b16 %v798
          %v839 = vpack.c.b16 %v824, %v823
          %v840 = vpack.c.b16 %v826, %v825
          %v841 = vpack.c.b16 %v828, %v827
          %v842 = vpack.c.b16 %v830, %v829
          %v843 = vpack.c.b16 %v832, %v831
          %v844 = vpack.c.b16 %v834, %v833
          %v845 = vpack.c.b16 %v836, %v835
          %v846 = vpack.c.b16 %v838, %v837
          %855 = vmatprep.subr.bf16.mxu0 0
          %856 = vmatpush1.bf16.msra.mxu0 %v799
          %857 = vmatprep.subr.bf16.mxu0 0
          %858 = vmatpush1.bf16.msra.mxu0 %v800
          %859 = vmatprep.subr.bf16.mxu0 0
          %860 = vmatpush1.bf16.msra.mxu0 %v801
          %861 = vmatprep.subr.bf16.mxu0 0
          %862 = vmatpush1.bf16.msra.mxu0 %v802
          %863 = vmatprep.subr.bf16.mxu0 0
          %864 = vmatpush1.bf16.msra.mxu0 %v803
          %865 = vmatprep.subr.bf16.mxu0 0
          %866 = vmatpush1.bf16.msra.mxu0 %v804
          %867 = vmatprep.subr.bf16.mxu0 0
          %868 = vmatpush1.bf16.msra.mxu0 %v805
          %869 = vmatprep.subr.bf16.mxu0 0
          %870 = vmatpush1.bf16.msra.mxu0 %v806
          %871 = vmatprep.subr.bf16.mxu0 0
          %872 = vmatpush1.bf16.msra.mxu0 0
          %873 = vmatprep.subr.bf16.mxu0 0
          %874 = vmatpush1.bf16.msra.mxu0 0
          %875 = vmatprep.subr.bf16.mxu0 0
          %876 = vmatpush1.bf16.msra.mxu0 0
          %877 = vmatprep.subr.bf16.mxu0 0
          %878 = vmatpush1.bf16.msra.mxu0 0
          %879 = vmatprep.subr.bf16.mxu0 0
          %880 = vmatpush1.bf16.msra.mxu0 0
          %881 = vmatprep.subr.bf16.mxu0 0
          %882 = vmatpush1.bf16.msra.mxu0 0
          %883 = vmatprep.subr.bf16.mxu0 0
          %884 = vmatpush1.bf16.msra.mxu0 0
          %885 = vmatprep.subr.bf16.mxu0 0
          %886 = vmatpush1.bf16.msra.mxu0 0
          %887 = vmatprep.mubr.bf16.mxu0 0
          %888 = vmatmul.mubr.bf16.gmra.mrb[0].mxu0 %v839
          %v889 = vpop.f32.mrb[0].mxu0
          %v890 = vadd.f32 0.0, %v889
          %v891 = vpop.f32.mrb[0].mxu0
          %v892 = vpop.f32.mrb[0].mxu0
          %v893 = vadd.f32 0.0, %v892
          %v894 = vpop.f32.mrb[0].mxu0
          %895 = vmatprep.mubr.bf16.mxu0 0
          %896 = vmatmul.mubr.bf16.gmra.mrb[0].mxu0 %v840
          %v897 = vpop.f32.mrb[0].mxu0
          %v898 = vadd.f32 0.0, %v897
          %v899 = vpop.f32.mrb[0].mxu0
          %v900 = vpop.f32.mrb[0].mxu0
          %v901 = vadd.f32 0.0, %v900
          %v902 = vpop.f32.mrb[0].mxu0
          %903 = vmatprep.mubr.bf16.mxu0 0
          %904 = vmatmul.mubr.bf16.gmra.mrb[0].mxu0 %v841
          %v905 = vpop.f32.mrb[0].mxu0
          %v906 = vadd.f32 0.0, %v905
          %v907 = vpop.f32.mrb[0].mxu0
          %v908 = vpop.f32.mrb[0].mxu0
          %v909 = vadd.f32 0.0, %v908
          %v910 = vpop.f32.mrb[0].mxu0
          %911 = vmatprep.mubr.bf16.mxu0 0
          %912 = vmatmul.mubr.bf16.gmra.mrb[0].mxu0 %v842
          %v913 = vpop.f32.mrb[0].mxu0
          %v914 = vadd.f32 0.0, %v913
          %v915 = vpop.f32.mrb[0].mxu0
          %v916 = vpop.f32.mrb[0].mxu0
          %v917 = vadd.f32 0.0, %v916
          %v918 = vpop.f32.mrb[0].mxu0
          %919 = vmatprep.mubr.bf16.mxu0 0
          %920 = vmatmul.mubr.bf16.gmra.mrb[0].mxu0 %v843
          %v921 = vpop.f32.mrb[0].mxu0
          %v922 = vadd.f32 0.0, %v921
          %v923 = vpop.f32.mrb[0].mxu0
          %v924 = vpop.f32.mrb[0].mxu0
          %v925 = vadd.f32 0.0, %v924
          %v926 = vpop.f32.mrb[0].mxu0
          %927 = vmatprep.mubr.bf16.mxu0 0
          %928 = vmatmul.mubr.bf16.gmra.mrb[0].mxu0 %v844
          %v929 = vpop.f32.mrb[0].mxu0
          %v930 = vadd.f32 0.0, %v929
          %v931 = vpop.f32.mrb[0].mxu0
          %v932 = vpop.f32.mrb[0].mxu0
          %v933 = vadd.f32 0.0, %v932
          %v934 = vpop.f32.mrb[0].mxu0
          %935 = vmatprep.mubr.bf16.mxu0 0
          %936 = vmatmul.mubr.bf16.gmra.mrb[0].mxu0 %v845
          %v937 = vpop.f32.mrb[0].mxu0
          %v938 = vadd.f32 0.0, %v937
          %v939 = vpop.f32.mrb[0].mxu0
          %v940 = vpop.f32.mrb[0].mxu0
          %v941 = vadd.f32 0.0, %v940
          %v942 = vpop.f32.mrb[0].mxu0
          %943 = vmatprep.mubr.bf16.mxu0 0
          %944 = vmatmul.mubr.bf16.gmra.mrb[0].mxu0 %v846
          %v945 = vpop.f32.mrb[0].mxu0
          %v946 = vadd.f32 0.0, %v945
          %v947 = vpop.f32.mrb[0].mxu0
          %v948 = vpop.f32.mrb[0].mxu0
          %v949 = vadd.f32 0.0, %v948
          %v950 = vpop.f32.mrb[0].mxu0
          %951 = vdwg.mxu0
          %v952 = vpack.c.bf16 %v893, %v890
          %v953 = vpack.c.bf16 %v901, %v898
          %v954 = vpack.c.bf16 %v909, %v906
          %v955 = vpack.c.bf16 %v917, %v914
          %v956 = vpack.c.bf16 %v925, %v922
          %v957 = vpack.c.bf16 %v933, %v930
          %v958 = vpack.c.bf16 %v941, %v938
          %v959 = vpack.c.bf16 %v949, %v946
          %v960 = vld [vmem:[#allocation14] sm:$0xf]
          %v961 = vld [vmem:[#allocation14 + $0x4] sm:$0xf]
          %v962 = vld [vmem:[#allocation14 + $0x8] sm:$0xf]
          %v963 = vld [vmem:[#allocation14 + $0xc] sm:$0xf]
          %v964 = vld [vmem:[#allocation14 + $0x10] sm:$0xf]
          %v965 = vld [vmem:[#allocation14 + $0x14] sm:$0xf]
          %v966 = vld [vmem:[#allocation14 + $0x18] sm:$0xf]
          %v967 = vld [vmem:[#allocation14 + $0x1c] sm:$0xf]
          %v968 = vld [vmem:[#allocation14 + $0x20] sm:$0xf]
          %v969 = vld [vmem:[#allocation14 + $0x24] sm:$0xf]
          %v970 = vld [vmem:[#allocation14 + $0x28] sm:$0xf]
          %v971 = vld [vmem:[#allocation14 + $0x2c] sm:$0xf]
          %v972 = vld [vmem:[#allocation14 + $0x30] sm:$0xf]
          %v973 = vld [vmem:[#allocation14 + $0x34] sm:$0xf]
          %v974 = vld [vmem:[#allocation14 + $0x38] sm:$0xf]
          %v975 = vld [vmem:[#allocation14 + $0x3c] sm:$0xf]
          %v992 = vunpack.c.l.b16 %v960
          %v993 = vunpack.c.l.b16 %v961
          %v994 = vunpack.c.l.b16 %v962
          %v995 = vunpack.c.l.b16 %v963
          %v996 = vunpack.c.l.b16 %v964
          %v997 = vunpack.c.l.b16 %v965
          %v998 = vunpack.c.l.b16 %v966
          %v999 = vunpack.c.l.b16 %v967
          %v1000 = vunpack.c.l.b16 %v968
          %v1001 = vunpack.c.l.b16 %v969
          %v1002 = vunpack.c.l.b16 %v970
          %v1003 = vunpack.c.l.b16 %v971
          %v1004 = vunpack.c.l.b16 %v972
          %v1005 = vunpack.c.l.b16 %v973
          %v1006 = vunpack.c.l.b16 %v974
          %v1007 = vunpack.c.l.b16 %v975
          %v1008 = vpack.c.b16 %v993, %v992
          %v1009 = vpack.c.b16 %v995, %v994
          %v1010 = vpack.c.b16 %v997, %v996
          %v1011 = vpack.c.b16 %v999, %v998
          %v1012 = vpack.c.b16 %v1001, %v1000
          %v1013 = vpack.c.b16 %v1003, %v1002
          %v1014 = vpack.c.b16 %v1005, %v1004
          %v1015 = vpack.c.b16 %v1007, %v1006
          %1024 = vmatprep.subr.bf16.mxu0 0
          %1025 = vmatpush1.bf16.msra.mxu0 %v1008
          %1026 = vmatprep.subr.bf16.mxu0 0
          %1027 = vmatpush1.bf16.msra.mxu0 %v1009
          %1028 = vmatprep.subr.bf16.mxu0 0
          %1029 = vmatpush1.bf16.msra.mxu0 %v1010
          %1030 = vmatprep.subr.bf16.mxu0 0
          %1031 = vmatpush1.bf16.msra.mxu0 %v1011
          %1032 = vmatprep.subr.bf16.mxu0 0
          %1033 = vmatpush1.bf16.msra.mxu0 %v1012
          %1034 = vmatprep.subr.bf16.mxu0 0
          %1035 = vmatpush1.bf16.msra.mxu0 %v1013
          %1036 = vmatprep.subr.bf16.mxu0 0
          %1037 = vmatpush1.bf16.msra.mxu0 %v1014
          %1038 = vmatprep.subr.bf16.mxu0 0
          %1039 = vmatpush1.bf16.msra.mxu0 %v1015
          %1040 = vmatprep.subr.bf16.mxu0 0
          %1041 = vmatpush1.bf16.msra.mxu0 0
          %1042 = vmatprep.subr.bf16.mxu0 0
          %1043 = vmatpush1.bf16.msra.mxu0 0
          %1044 = vmatprep.subr.bf16.mxu0 0
          %1045 = vmatpush1.bf16.msra.mxu0 0
          %1046 = vmatprep.subr.bf16.mxu0 0
          %1047 = vmatpush1.bf16.msra.mxu0 0
          %1048 = vmatprep.subr.bf16.mxu0 0
          %1049 = vmatpush1.bf16.msra.mxu0 0
          %1050 = vmatprep.subr.bf16.mxu0 0
          %1051 = vmatpush1.bf16.msra.mxu0 0
          %1052 = vmatprep.subr.bf16.mxu0 0
          %1053 = vmatpush1.bf16.msra.mxu0 0
          %1054 = vmatprep.subr.bf16.mxu0 0
          %1055 = vmatpush1.bf16.msra.mxu0 0
          %1056 = vmatprep.mubr.bf16.mxu0 0
          %1057 = vmatmul.mubr.bf16.gmra.mrb[0].mxu0 %v952
          %v1058 = vpop.f32.mrb[0].mxu0
          %v1059 = vadd.f32 0.0, %v1058
          %v1060 = vpop.f32.mrb[0].mxu0
          %v1061 = vpop.f32.mrb[0].mxu0
          %v1062 = vadd.f32 0.0, %v1061
          %v1063 = vpop.f32.mrb[0].mxu0
          %1064 = vmatprep.mubr.bf16.mxu0 0
          %1065 = vmatmul.mubr.bf16.gmra.mrb[0].mxu0 %v953
          %v1066 = vpop.f32.mrb[0].mxu0
          %v1067 = vadd.f32 0.0, %v1066
          %v1068 = vpop.f32.mrb[0].mxu0
          %v1069 = vpop.f32.mrb[0].mxu0
          %v1070 = vadd.f32 0.0, %v1069
          %v1071 = vpop.f32.mrb[0].mxu0
          %1072 = vmatprep.mubr.bf16.mxu0 0
          %1073 = vmatmul.mubr.bf16.gmra.mrb[0].mxu0 %v954
          %v1074 = vpop.f32.mrb[0].mxu0
          %v1075 = vadd.f32 0.0, %v1074
          %v1076 = vpop.f32.mrb[0].mxu0
          %v1077 = vpop.f32.mrb[0].mxu0
          %v1078 = vadd.f32 0.0, %v1077
          %v1079 = vpop.f32.mrb[0].mxu0
          %1080 = vmatprep.mubr.bf16.mxu0 0
          %1081 = vmatmul.mubr.bf16.gmra.mrb[0].mxu0 %v955
          %v1082 = vpop.f32.mrb[0].mxu0
          %v1083 = vadd.f32 0.0, %v1082
          %v1084 = vpop.f32.mrb[0].mxu0
          %v1085 = vpop.f32.mrb[0].mxu0
          %v1086 = vadd.f32 0.0, %v1085
          %v1087 = vpop.f32.mrb[0].mxu0
          %1088 = vmatprep.mubr.bf16.mxu0 0
          %1089 = vmatmul.mubr.bf16.gmra.mrb[0].mxu0 %v956
          %v1090 = vpop.f32.mrb[0].mxu0
          %v1091 = vadd.f32 0.0, %v1090
          %v1092 = vpop.f32.mrb[0].mxu0
          %v1093 = vpop.f32.mrb[0].mxu0
          %v1094 = vadd.f32 0.0, %v1093
          %v1095 = vpop.f32.mrb[0].mxu0
          %1096 = vmatprep.mubr.bf16.mxu0 0
          %1097 = vmatmul.mubr.bf16.gmra.mrb[0].mxu0 %v957
          %v1098 = vpop.f32.mrb[0].mxu0
          %v1099 = vadd.f32 0.0, %v1098
          %v1100 = vpop.f32.mrb[0].mxu0
          %v1101 = vpop.f32.mrb[0].mxu0
          %v1102 = vadd.f32 0.0, %v1101
          %v1103 = vpop.f32.mrb[0].mxu0
          %1104 = vmatprep.mubr.bf16.mxu0 0
          %1105 = vmatmul.mubr.bf16.gmra.mrb[0].mxu0 %v958
          %v1106 = vpop.f32.mrb[0].mxu0
          %v1107 = vadd.f32 0.0, %v1106
          %v1108 = vpop.f32.mrb[0].mxu0
          %v1109 = vpop.f32.mrb[0].mxu0
          %v1110 = vadd.f32 0.0, %v1109
          %v1111 = vpop.f32.mrb[0].mxu0
          %1112 = vmatprep.mubr.bf16.mxu0 0
          %1113 = vmatmul.mubr.bf16.gmra.mrb[0].mxu0 %v959
          %v1114 = vpop.f32.mrb[0].mxu0
          %v1115 = vadd.f32 0.0, %v1114
          %v1116 = vpop.f32.mrb[0].mxu0
          %v1117 = vpop.f32.mrb[0].mxu0
          %v1118 = vadd.f32 0.0, %v1117
          %v1119 = vpop.f32.mrb[0].mxu0
          %1120 = vdwg.mxu0
          %s1121 = scalar_lea.vmem [#allocation2], %s474
          %v1122 = vld [vmem:[%s1121] sm:$0xff]
          %v1123 = vld [vmem:[%s1121 + $0x8] sm:$0xff]
          %v1124 = vld [vmem:[%s1121 + $0x10] sm:$0xff]
          %v1125 = vld [vmem:[%s1121 + $0x18] sm:$0xff]
          %v1126 = vld [vmem:[%s1121 + $0x20] sm:$0xff]
          %v1127 = vld [vmem:[%s1121 + $0x28] sm:$0xff]
          %v1128 = vld [vmem:[%s1121 + $0x30] sm:$0xff]
          %v1129 = vld [vmem:[%s1121 + $0x38] sm:$0xff]
          %v1130 = vld [vmem:[%s1121 + $0x40] sm:$0xff]
          %v1131 = vld [vmem:[%s1121 + $0x48] sm:$0xff]
          %v1132 = vld [vmem:[%s1121 + $0x50] sm:$0xff]
          %v1133 = vld [vmem:[%s1121 + $0x58] sm:$0xff]
          %v1134 = vld [vmem:[%s1121 + $0x60] sm:$0xff]
          %v1135 = vld [vmem:[%s1121 + $0x68] sm:$0xff]
          %v1136 = vld [vmem:[%s1121 + $0x70] sm:$0xff]
          %v1137 = vld [vmem:[%s1121 + $0x78] sm:$0xff]
          %v1138 = vadd.f32 %v1122, %v1059
          %v1139 = vadd.f32 %v1123, %v1062
          %v1140 = vadd.f32 %v1124, %v1067
          %v1141 = vadd.f32 %v1125, %v1070
          %v1142 = vadd.f32 %v1126, %v1075
          %v1143 = vadd.f32 %v1127, %v1078
          %v1144 = vadd.f32 %v1128, %v1083
          %v1145 = vadd.f32 %v1129, %v1086
          %v1146 = vadd.f32 %v1130, %v1091
          %v1147 = vadd.f32 %v1131, %v1094
          %v1148 = vadd.f32 %v1132, %v1099
          %v1149 = vadd.f32 %v1133, %v1102
          %v1150 = vadd.f32 %v1134, %v1107
          %v1151 = vadd.f32 %v1135, %v1110
          %v1152 = vadd.f32 %v1136, %v1115
          %v1153 = vadd.f32 %v1137, %v1118
          %v1154 = vmax.f32 %v1138, 0.0
          %v1155 = vmax.f32 %v1139, 0.0
          %v1156 = vmax.f32 %v1140, 0.0
          %v1157 = vmax.f32 %v1141, 0.0
          %v1158 = vmax.f32 %v1142, 0.0
          %v1159 = vmax.f32 %v1143, 0.0
          %v1160 = vmax.f32 %v1144, 0.0
          %v1161 = vmax.f32 %v1145, 0.0
          %v1162 = vmax.f32 %v1146, 0.0
          %v1163 = vmax.f32 %v1147, 0.0
          %v1164 = vmax.f32 %v1148, 0.0
          %v1165 = vmax.f32 %v1149, 0.0
          %v1166 = vmax.f32 %v1150, 0.0
          %v1167 = vmax.f32 %v1151, 0.0
          %v1168 = vmax.f32 %v1152, 0.0
          %v1169 = vmax.f32 %v1153, 0.0
          %v1170 = vpack.c.bf16 %v1155, %v1154
          %v1171 = vpack.c.bf16 %v1157, %v1156
          %v1172 = vpack.c.bf16 %v1159, %v1158
          %v1173 = vpack.c.bf16 %v1161, %v1160
          %v1174 = vpack.c.bf16 %v1163, %v1162
          %v1175 = vpack.c.bf16 %v1165, %v1164
          %v1176 = vpack.c.bf16 %v1167, %v1166
          %v1177 = vpack.c.bf16 %v1169, %v1168
          %s1178 = sshra.s32 %s474, 4
          %s1179 = sand.u32 %s474, 15
          %s1180 = smul.addr %s1178, 8
          %s1181 = scalar_lea.vmem [#allocation4], %s1180
          %1182 = vst [vmem:[%s1181] sm:$0xff] %v1170
          %1183 = vst [vmem:[%s1181 + $0x8] sm:$0xff] %v1171
          %1184 = vst [vmem:[%s1181 + $0x10] sm:$0xff] %v1172
          %1185 = vst [vmem:[%s1181 + $0x18] sm:$0xff] %v1173
          %1186 = vst [vmem:[%s1181 + $0x20] sm:$0xff] %v1174
          %1187 = vst [vmem:[%s1181 + $0x28] sm:$0xff] %v1175
          %1188 = vst [vmem:[%s1181 + $0x30] sm:$0xff] %v1176
          %1189 = vst [vmem:[%s1181 + $0x38] sm:$0xff] %v1177
        $region104: #{tpu_custom_call.1} parent=59 // pred_fallthru
          _
        %p1190 = scmp.eq.s32.totalorder %s31, 2
        %p1191 = pnand %p1190, %p758
        %p1192 = pneg %p1191
        // Predicated region
        $region105: #{tpu_custom_call.1} parent=59 // pred_check
          _
        $region106: #{tpu_custom_call.1} parent=59 // pred_check_branch
          %1194 = sbr.rel (%p1191) target = $region108
        $region107: #{tpu_custom_call.1} parent=59 // pred_region
          %v1195 = vld [vmem:[#allocation4] sm:$0xff]
          %v1196 = vld [vmem:[#allocation4 + $0x8] sm:$0xff]
          %v1197 = vld [vmem:[#allocation4 + $0x10] sm:$0xff]
          %v1198 = vld [vmem:[#allocation4 + $0x18] sm:$0xff]
          %v1199 = vld [vmem:[#allocation4 + $0x20] sm:$0xff]
          %v1200 = vld [vmem:[#allocation4 + $0x28] sm:$0xff]
          %v1201 = vld [vmem:[#allocation4 + $0x30] sm:$0xff]
          %v1202 = vld [vmem:[#allocation4 + $0x38] sm:$0xff]
          %v1203 = vld [vmem:[#allocation11] sm:$0xf]
          %v1204 = vld [vmem:[#allocation11 + $0x4] sm:$0xf]
          %v1205 = vld [vmem:[#allocation11 + $0x8] sm:$0xf]
          %v1206 = vld [vmem:[#allocation11 + $0xc] sm:$0xf]
          %v1207 = vld [vmem:[#allocation11 + $0x10] sm:$0xf]
          %v1208 = vld [vmem:[#allocation11 + $0x14] sm:$0xf]
          %v1209 = vld [vmem:[#allocation11 + $0x18] sm:$0xf]
          %v1210 = vld [vmem:[#allocation11 + $0x1c] sm:$0xf]
          %v1211 = vld [vmem:[#allocation11 + $0x20] sm:$0xf]
          %v1212 = vld [vmem:[#allocation11 + $0x24] sm:$0xf]
          %v1213 = vld [vmem:[#allocation11 + $0x28] sm:$0xf]
          %v1214 = vld [vmem:[#allocation11 + $0x2c] sm:$0xf]
          %v1215 = vld [vmem:[#allocation11 + $0x30] sm:$0xf]
          %v1216 = vld [vmem:[#allocation11 + $0x34] sm:$0xf]
          %v1217 = vld [vmem:[#allocation11 + $0x38] sm:$0xf]
          %v1218 = vld [vmem:[#allocation11 + $0x3c] sm:$0xf]
          %v1235 = vunpack.c.l.b16 %v1203
          %v1236 = vunpack.c.l.b16 %v1204
          %v1237 = vunpack.c.l.b16 %v1205
          %v1238 = vunpack.c.l.b16 %v1206
          %v1239 = vunpack.c.l.b16 %v1207
          %v1240 = vunpack.c.l.b16 %v1208
          %v1241 = vunpack.c.l.b16 %v1209
          %v1242 = vunpack.c.l.b16 %v1210
          %v1243 = vunpack.c.l.b16 %v1211
          %v1244 = vunpack.c.l.b16 %v1212
          %v1245 = vunpack.c.l.b16 %v1213
          %v1246 = vunpack.c.l.b16 %v1214
          %v1247 = vunpack.c.l.b16 %v1215
          %v1248 = vunpack.c.l.b16 %v1216
          %v1249 = vunpack.c.l.b16 %v1217
          %v1250 = vunpack.c.l.b16 %v1218
          %v1251 = vpack.c.b16 %v1236, %v1235
          %v1252 = vpack.c.b16 %v1238, %v1237
          %v1253 = vpack.c.b16 %v1240, %v1239
          %v1254 = vpack.c.b16 %v1242, %v1241
          %v1255 = vpack.c.b16 %v1244, %v1243
          %v1256 = vpack.c.b16 %v1246, %v1245
          %v1257 = vpack.c.b16 %v1248, %v1247
          %v1258 = vpack.c.b16 %v1250, %v1249
          %1267 = vmatprep.subr.bf16.mxu0 0
          %1268 = vmatpush1.bf16.msra.mxu0 %v1195
          %1269 = vmatprep.subr.bf16.mxu0 0
          %1270 = vmatpush1.bf16.msra.mxu0 %v1196
          %1271 = vmatprep.subr.bf16.mxu0 0
          %1272 = vmatpush1.bf16.msra.mxu0 %v1197
          %1273 = vmatprep.subr.bf16.mxu0 0
          %1274 = vmatpush1.bf16.msra.mxu0 %v1198
          %1275 = vmatprep.subr.bf16.mxu0 0
          %1276 = vmatpush1.bf16.msra.mxu0 %v1199
          %1277 = vmatprep.subr.bf16.mxu0 0
          %1278 = vmatpush1.bf16.msra.mxu0 %v1200
          %1279 = vmatprep.subr.bf16.mxu0 0
          %1280 = vmatpush1.bf16.msra.mxu0 %v1201
          %1281 = vmatprep.subr.bf16.mxu0 0
          %1282 = vmatpush1.bf16.msra.mxu0 %v1202
          %1283 = vmatprep.subr.bf16.mxu0 0
          %1284 = vmatpush1.bf16.msra.mxu0 0
          %1285 = vmatprep.subr.bf16.mxu0 0
          %1286 = vmatpush1.bf16.msra.mxu0 0
          %1287 = vmatprep.subr.bf16.mxu0 0
          %1288 = vmatpush1.bf16.msra.mxu0 0
          %1289 = vmatprep.subr.bf16.mxu0 0
          %1290 = vmatpush1.bf16.msra.mxu0 0
          %1291 = vmatprep.subr.bf16.mxu0 0
          %1292 = vmatpush1.bf16.msra.mxu0 0
          %1293 = vmatprep.subr.bf16.mxu0 0
          %1294 = vmatpush1.bf16.msra.mxu0 0
          %1295 = vmatprep.subr.bf16.mxu0 0
          %1296 = vmatpush1.bf16.msra.mxu0 0
          %1297 = vmatprep.subr.bf16.mxu0 0
          %1298 = vmatpush1.bf16.msra.mxu0 0
          %1299 = vmatprep.mubr.bf16.mxu0 0
          %1300 = vmatmul.mubr.bf16.gmra.mrb[0].mxu0 %v1251
          %v1301 = vpop.f32.mrb[0].mxu0
          %v1302 = vadd.f32 0.0, %v1301
          %v1303 = vpop.f32.mrb[0].mxu0
          %v1304 = vpop.f32.mrb[0].mxu0
          %v1305 = vadd.f32 0.0, %v1304
          %v1306 = vpop.f32.mrb[0].mxu0
          %1307 = vmatprep.mubr.bf16.mxu0 0
          %1308 = vmatmul.mubr.bf16.gmra.mrb[0].mxu0 %v1252
          %v1309 = vpop.f32.mrb[0].mxu0
          %v1310 = vadd.f32 0.0, %v1309
          %v1311 = vpop.f32.mrb[0].mxu0
          %v1312 = vpop.f32.mrb[0].mxu0
          %v1313 = vadd.f32 0.0, %v1312
          %v1314 = vpop.f32.mrb[0].mxu0
          %1315 = vmatprep.mubr.bf16.mxu0 0
          %1316 = vmatmul.mubr.bf16.gmra.mrb[0].mxu0 %v1253
          %v1317 = vpop.f32.mrb[0].mxu0
          %v1318 = vadd.f32 0.0, %v1317
          %v1319 = vpop.f32.mrb[0].mxu0
          %v1320 = vpop.f32.mrb[0].mxu0
          %v1321 = vadd.f32 0.0, %v1320
          %v1322 = vpop.f32.mrb[0].mxu0
          %1323 = vmatprep.mubr.bf16.mxu0 0
          %1324 = vmatmul.mubr.bf16.gmra.mrb[0].mxu0 %v1254
          %v1325 = vpop.f32.mrb[0].mxu0
          %v1326 = vadd.f32 0.0, %v1325
          %v1327 = vpop.f32.mrb[0].mxu0
          %v1328 = vpop.f32.mrb[0].mxu0
          %v1329 = vadd.f32 0.0, %v1328
          %v1330 = vpop.f32.mrb[0].mxu0
          %1331 = vmatprep.mubr.bf16.mxu0 0
          %1332 = vmatmul.mubr.bf16.gmra.mrb[0].mxu0 %v1255
          %v1333 = vpop.f32.mrb[0].mxu0
          %v1334 = vadd.f32 0.0, %v1333
          %v1335 = vpop.f32.mrb[0].mxu0
          %v1336 = vpop.f32.mrb[0].mxu0
          %v1337 = vadd.f32 0.0, %v1336
          %v1338 = vpop.f32.mrb[0].mxu0
          %1339 = vmatprep.mubr.bf16.mxu0 0
          %1340 = vmatmul.mubr.bf16.gmra.mrb[0].mxu0 %v1256
          %v1341 = vpop.f32.mrb[0].mxu0
          %v1342 = vadd.f32 0.0, %v1341
          %v1343 = vpop.f32.mrb[0].mxu0
          %v1344 = vpop.f32.mrb[0].mxu0
          %v1345 = vadd.f32 0.0, %v1344
          %v1346 = vpop.f32.mrb[0].mxu0
          %1347 = vmatprep.mubr.bf16.mxu0 0
          %1348 = vmatmul.mubr.bf16.gmra.mrb[0].mxu0 %v1257
          %v1349 = vpop.f32.mrb[0].mxu0
          %v1350 = vadd.f32 0.0, %v1349
          %v1351 = vpop.f32.mrb[0].mxu0
          %v1352 = vpop.f32.mrb[0].mxu0
          %v1353 = vadd.f32 0.0, %v1352
          %v1354 = vpop.f32.mrb[0].mxu0
          %1355 = vmatprep.mubr.bf16.mxu0 0
          %1356 = vmatmul.mubr.bf16.gmra.mrb[0].mxu0 %v1258
          %v1357 = vpop.f32.mrb[0].mxu0
          %v1358 = vadd.f32 0.0, %v1357
          %v1359 = vpop.f32.mrb[0].mxu0
          %v1360 = vpop.f32.mrb[0].mxu0
          %v1361 = vadd.f32 0.0, %v1360
          %v1362 = vpop.f32.mrb[0].mxu0
          %1363 = vdwg.mxu0
          %v1364 = vld [vmem:[#allocation10] sm:$0xf]
          %v1365 = vld [vmem:[#allocation10 + $0x4] sm:$0xf]
          %v1366 = vld [vmem:[#allocation10 + $0x8] sm:$0xf]
          %v1367 = vld [vmem:[#allocation10 + $0xc] sm:$0xf]
          %v1368 = vld [vmem:[#allocation10 + $0x10] sm:$0xf]
          %v1369 = vld [vmem:[#allocation10 + $0x14] sm:$0xf]
          %v1370 = vld [vmem:[#allocation10 + $0x18] sm:$0xf]
          %v1371 = vld [vmem:[#allocation10 + $0x1c] sm:$0xf]
          %v1372 = vld [vmem:[#allocation10 + $0x20] sm:$0xf]
          %v1373 = vld [vmem:[#allocation10 + $0x24] sm:$0xf]
          %v1374 = vld [vmem:[#allocation10 + $0x28] sm:$0xf]
          %v1375 = vld [vmem:[#allocation10 + $0x2c] sm:$0xf]
          %v1376 = vld [vmem:[#allocation10 + $0x30] sm:$0xf]
          %v1377 = vld [vmem:[#allocation10 + $0x34] sm:$0xf]
          %v1378 = vld [vmem:[#allocation10 + $0x38] sm:$0xf]
          %v1379 = vld [vmem:[#allocation10 + $0x3c] sm:$0xf]
          %v1380 = vld [vmem:[#allocation16] sm:$0xf]
          %v1381 = vld [vmem:[#allocation16 + $0x4] sm:$0xf]
          %v1382 = vld [vmem:[#allocation16 + $0x8] sm:$0xf]
          %v1383 = vld [vmem:[#allocation16 + $0xc] sm:$0xf]
          %v1384 = vld [vmem:[#allocation16 + $0x10] sm:$0xf]
          %v1385 = vld [vmem:[#allocation16 + $0x14] sm:$0xf]
          %v1386 = vld [vmem:[#allocation16 + $0x18] sm:$0xf]
          %v1387 = vld [vmem:[#allocation16 + $0x1c] sm:$0xf]
          %v1388 = vld [vmem:[#allocation16 + $0x20] sm:$0xf]
          %v1389 = vld [vmem:[#allocation16 + $0x24] sm:$0xf]
          %v1390 = vld [vmem:[#allocation16 + $0x28] sm:$0xf]
          %v1391 = vld [vmem:[#allocation16 + $0x2c] sm:$0xf]
          %v1392 = vld [vmem:[#allocation16 + $0x30] sm:$0xf]
          %v1393 = vld [vmem:[#allocation16 + $0x34] sm:$0xf]
          %v1394 = vld [vmem:[#allocation16 + $0x38] sm:$0xf]
          %v1395 = vld [vmem:[#allocation16 + $0x3c] sm:$0xf]
          %v1396 = vpack.c.bf16 %v1305, %v1302
          %v1397 = vpack.c.bf16 %v1313, %v1310
          %v1398 = vpack.c.bf16 %v1321, %v1318
          %v1399 = vpack.c.bf16 %v1329, %v1326
          %v1400 = vpack.c.bf16 %v1337, %v1334
          %v1401 = vpack.c.bf16 %v1345, %v1342
          %v1402 = vpack.c.bf16 %v1353, %v1350
          %v1403 = vpack.c.bf16 %v1361, %v1358
          %v1404 = vld [vmem:[#allocation17] sm:$0xf]
          %v1405 = vld [vmem:[#allocation17 + $0x4] sm:$0xf]
          %v1406 = vld [vmem:[#allocation17 + $0x8] sm:$0xf]
          %v1407 = vld [vmem:[#allocation17 + $0xc] sm:$0xf]
          %v1408 = vld [vmem:[#allocation17 + $0x10] sm:$0xf]
          %v1409 = vld [vmem:[#allocation17 + $0x14] sm:$0xf]
          %v1410 = vld [vmem:[#allocation17 + $0x18] sm:$0xf]
          %v1411 = vld [vmem:[#allocation17 + $0x1c] sm:$0xf]
          %v1412 = vld [vmem:[#allocation17 + $0x20] sm:$0xf]
          %v1413 = vld [vmem:[#allocation17 + $0x24] sm:$0xf]
          %v1414 = vld [vmem:[#allocation17 + $0x28] sm:$0xf]
          %v1415 = vld [vmem:[#allocation17 + $0x2c] sm:$0xf]
          %v1416 = vld [vmem:[#allocation17 + $0x30] sm:$0xf]
          %v1417 = vld [vmem:[#allocation17 + $0x34] sm:$0xf]
          %v1418 = vld [vmem:[#allocation17 + $0x38] sm:$0xf]
          %v1419 = vld [vmem:[#allocation17 + $0x3c] sm:$0xf]
          %v1436 = vunpack.c.l.b16 %v1404
          %v1437 = vunpack.c.l.b16 %v1405
          %v1438 = vunpack.c.l.b16 %v1406
          %v1439 = vunpack.c.l.b16 %v1407
          %v1440 = vunpack.c.l.b16 %v1408
          %v1441 = vunpack.c.l.b16 %v1409
          %v1442 = vunpack.c.l.b16 %v1410
          %v1443 = vunpack.c.l.b16 %v1411
          %v1444 = vunpack.c.l.b16 %v1412
          %v1445 = vunpack.c.l.b16 %v1413
          %v1446 = vunpack.c.l.b16 %v1414
          %v1447 = vunpack.c.l.b16 %v1415
          %v1448 = vunpack.c.l.b16 %v1416
          %v1449 = vunpack.c.l.b16 %v1417
          %v1450 = vunpack.c.l.b16 %v1418
          %v1451 = vunpack.c.l.b16 %v1419
          %v1452 = vpack.c.b16 %v1437, %v1436
          %v1453 = vpack.c.b16 %v1439, %v1438
          %v1454 = vpack.c.b16 %v1441, %v1440
          %v1455 = vpack.c.b16 %v1443, %v1442
          %v1456 = vpack.c.b16 %v1445, %v1444
          %v1457 = vpack.c.b16 %v1447, %v1446
          %v1458 = vpack.c.b16 %v1449, %v1448
          %v1459 = vpack.c.b16 %v1451, %v1450
          %1468 = vmatprep.subr.bf16.mxu0 0
          %1469 = vmatpush1.bf16.msra.mxu0 %v1452
          %1470 = vmatprep.subr.bf16.mxu0 0
          %1471 = vmatpush1.bf16.msra.mxu0 %v1453
          %1472 = vmatprep.subr.bf16.mxu0 0
          %1473 = vmatpush1.bf16.msra.mxu0 %v1454
          %1474 = vmatprep.subr.bf16.mxu0 0
          %1475 = vmatpush1.bf16.msra.mxu0 %v1455
          %1476 = vmatprep.subr.bf16.mxu0 0
          %1477 = vmatpush1.bf16.msra.mxu0 %v1456
          %1478 = vmatprep.subr.bf16.mxu0 0
          %1479 = vmatpush1.bf16.msra.mxu0 %v1457
          %1480 = vmatprep.subr.bf16.mxu0 0
          %1481 = vmatpush1.bf16.msra.mxu0 %v1458
          %1482 = vmatprep.subr.bf16.mxu0 0
          %1483 = vmatpush1.bf16.msra.mxu0 %v1459
          %1484 = vmatprep.subr.bf16.mxu0 0
          %1485 = vmatpush1.bf16.msra.mxu0 0
          %1486 = vmatprep.subr.bf16.mxu0 0
          %1487 = vmatpush1.bf16.msra.mxu0 0
          %1488 = vmatprep.subr.bf16.mxu0 0
          %1489 = vmatpush1.bf16.msra.mxu0 0
          %1490 = vmatprep.subr.bf16.mxu0 0
          %1491 = vmatpush1.bf16.msra.mxu0 0
          %1492 = vmatprep.subr.bf16.mxu0 0
          %1493 = vmatpush1.bf16.msra.mxu0 0
          %1494 = vmatprep.subr.bf16.mxu0 0
          %1495 = vmatpush1.bf16.msra.mxu0 0
          %1496 = vmatprep.subr.bf16.mxu0 0
          %1497 = vmatpush1.bf16.msra.mxu0 0
          %1498 = vmatprep.subr.bf16.mxu0 0
          %1499 = vmatpush1.bf16.msra.mxu0 0
          %1500 = vmatprep.mubr.bf16.mxu0 0
          %1501 = vmatmul.mubr.bf16.gmra.mrb[0].mxu0 %v1396
          %v1502 = vpop.f32.mrb[0].mxu0
          %v1503 = vadd.f32 0.0, %v1502
          %v1504 = vpop.f32.mrb[0].mxu0
          %v1505 = vpop.f32.mrb[0].mxu0
          %v1506 = vadd.f32 0.0, %v1505
          %v1507 = vpop.f32.mrb[0].mxu0
          %1508 = vmatprep.mubr.bf16.mxu0 0
          %1509 = vmatmul.mubr.bf16.gmra.mrb[0].mxu0 %v1397
          %v1510 = vpop.f32.mrb[0].mxu0
          %v1511 = vadd.f32 0.0, %v1510
          %v1512 = vpop.f32.mrb[0].mxu0
          %v1513 = vpop.f32.mrb[0].mxu0
          %v1514 = vadd.f32 0.0, %v1513
          %v1515 = vpop.f32.mrb[0].mxu0
          %1516 = vmatprep.mubr.bf16.mxu0 0
          %1517 = vmatmul.mubr.bf16.gmra.mrb[0].mxu0 %v1398
          %v1518 = vpop.f32.mrb[0].mxu0
          %v1519 = vadd.f32 0.0, %v1518
          %v1520 = vpop.f32.mrb[0].mxu0
          %v1521 = vpop.f32.mrb[0].mxu0
          %v1522 = vadd.f32 0.0, %v1521
          %v1523 = vpop.f32.mrb[0].mxu0
          %1524 = vmatprep.mubr.bf16.mxu0 0
          %1525 = vmatmul.mubr.bf16.gmra.mrb[0].mxu0 %v1399
          %v1526 = vpop.f32.mrb[0].mxu0
          %v1527 = vadd.f32 0.0, %v1526
          %v1528 = vpop.f32.mrb[0].mxu0
          %v1529 = vpop.f32.mrb[0].mxu0
          %v1530 = vadd.f32 0.0, %v1529
          %v1531 = vpop.f32.mrb[0].mxu0
          %1532 = vmatprep.mubr.bf16.mxu0 0
          %1533 = vmatmul.mubr.bf16.gmra.mrb[0].mxu0 %v1400
          %v1534 = vpop.f32.mrb[0].mxu0
          %v1535 = vadd.f32 0.0, %v1534
          %v1536 = vpop.f32.mrb[0].mxu0
          %v1537 = vpop.f32.mrb[0].mxu0
          %v1538 = vadd.f32 0.0, %v1537
          %v1539 = vpop.f32.mrb[0].mxu0
          %1540 = vmatprep.mubr.bf16.mxu0 0
          %1541 = vmatmul.mubr.bf16.gmra.mrb[0].mxu0 %v1401
          %v1542 = vpop.f32.mrb[0].mxu0
          %v1543 = vadd.f32 0.0, %v1542
          %v1544 = vpop.f32.mrb[0].mxu0
          %v1545 = vpop.f32.mrb[0].mxu0
          %v1546 = vadd.f32 0.0, %v1545
          %v1547 = vpop.f32.mrb[0].mxu0
          %1548 = vmatprep.mubr.bf16.mxu0 0
          %1549 = vmatmul.mubr.bf16.gmra.mrb[0].mxu0 %v1402
          %v1550 = vpop.f32.mrb[0].mxu0
          %v1551 = vadd.f32 0.0, %v1550
          %v1552 = vpop.f32.mrb[0].mxu0
          %v1553 = vpop.f32.mrb[0].mxu0
          %v1554 = vadd.f32 0.0, %v1553
          %v1555 = vpop.f32.mrb[0].mxu0
          %1556 = vmatprep.mubr.bf16.mxu0 0
          %1557 = vmatmul.mubr.bf16.gmra.mrb[0].mxu0 %v1403
          %v1558 = vpop.f32.mrb[0].mxu0
          %v1559 = vadd.f32 0.0, %v1558
          %v1560 = vpop.f32.mrb[0].mxu0
          %v1561 = vpop.f32.mrb[0].mxu0
          %v1562 = vadd.f32 0.0, %v1561
          %v1563 = vpop.f32.mrb[0].mxu0
          %1564 = vdwg.mxu0
          %v1581 = vunpack.c.l.b16 %v1364
          %v1582 = vunpack.c.l.b16 %v1365
          %v1583 = vunpack.c.l.b16 %v1366
          %v1584 = vunpack.c.l.b16 %v1367
          %v1585 = vunpack.c.l.b16 %v1368
          %v1586 = vunpack.c.l.b16 %v1369
          %v1587 = vunpack.c.l.b16 %v1370
          %v1588 = vunpack.c.l.b16 %v1371
          %v1589 = vunpack.c.l.b16 %v1372
          %v1590 = vunpack.c.l.b16 %v1373
          %v1591 = vunpack.c.l.b16 %v1374
          %v1592 = vunpack.c.l.b16 %v1375
          %v1593 = vunpack.c.l.b16 %v1376
          %v1594 = vunpack.c.l.b16 %v1377
          %v1595 = vunpack.c.l.b16 %v1378
          %v1596 = vunpack.c.l.b16 %v1379
          %v1597 = vpack.c.b16 %v1582, %v1581
          %v1598 = vpack.c.b16 %v1584, %v1583
          %v1599 = vpack.c.b16 %v1586, %v1585
          %v1600 = vpack.c.b16 %v1588, %v1587
          %v1601 = vpack.c.b16 %v1590, %v1589
          %v1602 = vpack.c.b16 %v1592, %v1591
          %v1603 = vpack.c.b16 %v1594, %v1593
          %v1604 = vpack.c.b16 %v1596, %v1595
          %v1629 = vunpack.c.l.b16 %v1380
          %v1630 = vunpack.c.l.b16 %v1381
          %v1631 = vunpack.c.l.b16 %v1382
          %v1632 = vunpack.c.l.b16 %v1383
          %v1633 = vunpack.c.l.b16 %v1384
          %v1634 = vunpack.c.l.b16 %v1385
          %v1635 = vunpack.c.l.b16 %v1386
          %v1636 = vunpack.c.l.b16 %v1387
          %v1637 = vunpack.c.l.b16 %v1388
          %v1638 = vunpack.c.l.b16 %v1389
          %v1639 = vunpack.c.l.b16 %v1390
          %v1640 = vunpack.c.l.b16 %v1391
          %v1641 = vunpack.c.l.b16 %v1392
          %v1642 = vunpack.c.l.b16 %v1393
          %v1643 = vunpack.c.l.b16 %v1394
          %v1644 = vunpack.c.l.b16 %v1395
          %v1645 = vpack.c.b16 %v1630, %v1629
          %v1646 = vpack.c.b16 %v1632, %v1631
          %v1647 = vpack.c.b16 %v1634, %v1633
          %v1648 = vpack.c.b16 %v1636, %v1635
          %v1649 = vpack.c.b16 %v1638, %v1637
          %v1650 = vpack.c.b16 %v1640, %v1639
          %v1651 = vpack.c.b16 %v1642, %v1641
          %v1652 = vpack.c.b16 %v1644, %v1643
          %1661 = vmatprep.subr.bf16.mxu0 0
          %1662 = vmatpush1.bf16.msra.mxu0 %v1645
          %1663 = vmatprep.subr.bf16.mxu0 0
          %1664 = vmatpush1.bf16.msra.mxu0 %v1646
          %1665 = vmatprep.subr.bf16.mxu0 0
          %1666 = vmatpush1.bf16.msra.mxu0 %v1647
          %1667 = vmatprep.subr.bf16.mxu0 0
          %1668 = vmatpush1.bf16.msra.mxu0 %v1648
          %1669 = vmatprep.subr.bf16.mxu0 0
          %1670 = vmatpush1.bf16.msra.mxu0 %v1649
          %1671 = vmatprep.subr.bf16.mxu0 0
          %1672 = vmatpush1.bf16.msra.mxu0 %v1650
          %1673 = vmatprep.subr.bf16.mxu0 0
          %1674 = vmatpush1.bf16.msra.mxu0 %v1651
          %1675 = vmatprep.subr.bf16.mxu0 0
          %1676 = vmatpush1.bf16.msra.mxu0 %v1652
          %1677 = vmatprep.subr.bf16.mxu0 0
          %1678 = vmatpush1.bf16.msra.mxu0 0
          %1679 = vmatprep.subr.bf16.mxu0 0
          %1680 = vmatpush1.bf16.msra.mxu0 0
          %1681 = vmatprep.subr.bf16.mxu0 0
          %1682 = vmatpush1.bf16.msra.mxu0 0
          %1683 = vmatprep.subr.bf16.mxu0 0
          %1684 = vmatpush1.bf16.msra.mxu0 0
          %1685 = vmatprep.subr.bf16.mxu0 0
          %1686 = vmatpush1.bf16.msra.mxu0 0
          %1687 = vmatprep.subr.bf16.mxu0 0
          %1688 = vmatpush1.bf16.msra.mxu0 0
          %1689 = vmatprep.subr.bf16.mxu0 0
          %1690 = vmatpush1.bf16.msra.mxu0 0
          %1691 = vmatprep.subr.bf16.mxu0 0
          %1692 = vmatpush1.bf16.msra.mxu0 0
          %1693 = vmatprep.mubr.bf16.mxu0 0
          %1694 = vmatmul.mubr.bf16.gmra.mrb[0].mxu0 %v1597
          %v1695 = vpop.f32.mrb[0].mxu0
          %v1696 = vadd.f32 %v1503, %v1695
          %v1697 = vpop.f32.mrb[0].mxu0
          %v1698 = vpop.f32.mrb[0].mxu0
          %v1699 = vadd.f32 %v1506, %v1698
          %v1700 = vpop.f32.mrb[0].mxu0
          %1701 = vmatprep.mubr.bf16.mxu0 0
          %1702 = vmatmul.mubr.bf16.gmra.mrb[0].mxu0 %v1598
          %v1703 = vpop.f32.mrb[0].mxu0
          %v1704 = vadd.f32 %v1511, %v1703
          %v1705 = vpop.f32.mrb[0].mxu0
          %v1706 = vpop.f32.mrb[0].mxu0
          %v1707 = vadd.f32 %v1514, %v1706
          %v1708 = vpop.f32.mrb[0].mxu0
          %1709 = vmatprep.mubr.bf16.mxu0 0
          %1710 = vmatmul.mubr.bf16.gmra.mrb[0].mxu0 %v1599
          %v1711 = vpop.f32.mrb[0].mxu0
          %v1712 = vadd.f32 %v1519, %v1711
          %v1713 = vpop.f32.mrb[0].mxu0
          %v1714 = vpop.f32.mrb[0].mxu0
          %v1715 = vadd.f32 %v1522, %v1714
          %v1716 = vpop.f32.mrb[0].mxu0
          %1717 = vmatprep.mubr.bf16.mxu0 0
          %1718 = vmatmul.mubr.bf16.gmra.mrb[0].mxu0 %v1600
          %v1719 = vpop.f32.mrb[0].mxu0
          %v1720 = vadd.f32 %v1527, %v1719
          %v1721 = vpop.f32.mrb[0].mxu0
          %v1722 = vpop.f32.mrb[0].mxu0
          %v1723 = vadd.f32 %v1530, %v1722
          %v1724 = vpop.f32.mrb[0].mxu0
          %1725 = vmatprep.mubr.bf16.mxu0 0
          %1726 = vmatmul.mubr.bf16.gmra.mrb[0].mxu0 %v1601
          %v1727 = vpop.f32.mrb[0].mxu0
          %v1728 = vadd.f32 %v1535, %v1727
          %v1729 = vpop.f32.mrb[0].mxu0
          %v1730 = vpop.f32.mrb[0].mxu0
          %v1731 = vadd.f32 %v1538, %v1730
          %v1732 = vpop.f32.mrb[0].mxu0
          %1733 = vmatprep.mubr.bf16.mxu0 0
          %1734 = vmatmul.mubr.bf16.gmra.mrb[0].mxu0 %v1602
          %v1735 = vpop.f32.mrb[0].mxu0
          %v1736 = vadd.f32 %v1543, %v1735
          %v1737 = vpop.f32.mrb[0].mxu0
          %v1738 = vpop.f32.mrb[0].mxu0
          %v1739 = vadd.f32 %v1546, %v1738
          %v1740 = vpop.f32.mrb[0].mxu0
          %1741 = vmatprep.mubr.bf16.mxu0 0
          %1742 = vmatmul.mubr.bf16.gmra.mrb[0].mxu0 %v1603
          %v1743 = vpop.f32.mrb[0].mxu0
          %v1744 = vadd.f32 %v1551, %v1743
          %v1745 = vpop.f32.mrb[0].mxu0
          %v1746 = vpop.f32.mrb[0].mxu0
          %v1747 = vadd.f32 %v1554, %v1746
          %v1748 = vpop.f32.mrb[0].mxu0
          %1749 = vmatprep.mubr.bf16.mxu0 0
          %1750 = vmatmul.mubr.bf16.gmra.mrb[0].mxu0 %v1604
          %v1751 = vpop.f32.mrb[0].mxu0
          %v1752 = vadd.f32 %v1559, %v1751
          %v1753 = vpop.f32.mrb[0].mxu0
          %v1754 = vpop.f32.mrb[0].mxu0
          %v1755 = vadd.f32 %v1562, %v1754
          %v1756 = vpop.f32.mrb[0].mxu0
          %1757 = vdwg.mxu0
          %v1758 = vld [vmem:[%s9] sm:$0x1]
          %v1760 = vlaneseq
          %v1761 = vshrl.u32 %v1760, 7
          %v1762 = vsub.s32 0, %v1761
          %v1763 = vrot.slane %v1758, %v1762
          %v1765 = vadd.f32 %v1696, %v1763
          %v1766 = vadd.f32 %v1699, %v1763
          %v1767 = vadd.f32 %v1704, %v1763
          %v1768 = vadd.f32 %v1707, %v1763
          %v1769 = vadd.f32 %v1712, %v1763
          %v1770 = vadd.f32 %v1715, %v1763
          %v1771 = vadd.f32 %v1720, %v1763
          %v1772 = vadd.f32 %v1723, %v1763
          %v1773 = vadd.f32 %v1728, %v1763
          %v1774 = vadd.f32 %v1731, %v1763
          %v1775 = vadd.f32 %v1736, %v1763
          %v1776 = vadd.f32 %v1739, %v1763
          %v1777 = vadd.f32 %v1744, %v1763
          %v1778 = vadd.f32 %v1747, %v1763
          %v1779 = vadd.f32 %v1752, %v1763
          %v1780 = vadd.f32 %v1755, %v1763
          %v1781 = vmax.f32 %v1765, 0.0
          %v1782 = vmax.f32 %v1766, 0.0
          %v1783 = vmax.f32 %v1767, 0.0
          %v1784 = vmax.f32 %v1768, 0.0
          %v1785 = vmax.f32 %v1769, 0.0
          %v1786 = vmax.f32 %v1770, 0.0
          %v1787 = vmax.f32 %v1771, 0.0
          %v1788 = vmax.f32 %v1772, 0.0
          %v1789 = vmax.f32 %v1773, 0.0
          %v1790 = vmax.f32 %v1774, 0.0
          %v1791 = vmax.f32 %v1775, 0.0
          %v1792 = vmax.f32 %v1776, 0.0
          %v1793 = vmax.f32 %v1777, 0.0
          %v1794 = vmax.f32 %v1778, 0.0
          %v1795 = vmax.f32 %v1779, 0.0
          %v1796 = vmax.f32 %v1780, 0.0
          %v1797 = vld [vmem:[%s4] sm:$0xff]
          %1798 = vmatprep.subr.mxu0 0.0
          %1799 = vmatpush1.msra.mxu0 %v1781
          %1800 = vmatprep.subr.mxu0 0.0
          %1801 = vmatpush1.msra.mxu0 %v1782
          %1802 = vmatprep.subr.mxu0 0.0
          %1803 = vmatpush1.msra.mxu0 %v1783
          %1804 = vmatprep.subr.mxu0 0.0
          %1805 = vmatpush1.msra.mxu0 %v1784
          %1806 = vmatprep.subr.mxu0 0.0
          %1807 = vmatpush1.msra.mxu0 %v1785
          %1808 = vmatprep.subr.mxu0 0.0
          %1809 = vmatpush1.msra.mxu0 %v1786
          %1810 = vmatprep.subr.mxu0 0.0
          %1811 = vmatpush1.msra.mxu0 %v1787
          %1812 = vmatprep.subr.mxu0 0.0
          %1813 = vmatpush1.msra.mxu0 %v1788
          %1814 = vmatprep.subr.mxu0 0.0
          %1815 = vmatpush1.msra.mxu0 %v1789
          %1816 = vmatprep.subr.mxu0 0.0
          %1817 = vmatpush1.msra.mxu0 %v1790
          %1818 = vmatprep.subr.mxu0 0.0
          %1819 = vmatpush1.msra.mxu0 %v1791
          %1820 = vmatprep.subr.mxu0 0.0
          %1821 = vmatpush1.msra.mxu0 %v1792
          %1822 = vmatprep.subr.mxu0 0.0
          %1823 = vmatpush1.msra.mxu0 %v1793
          %1824 = vmatprep.subr.mxu0 0.0
          %1825 = vmatpush1.msra.mxu0 %v1794
          %1826 = vmatprep.subr.mxu0 0.0
          %1827 = vmatpush1.msra.mxu0 %v1795
          %1828 = vmatprep.subr.mxu0 0.0
          %1829 = vmatpush1.msra.mxu0 %v1796
          %1830 = vmatprep.subr.mxu0 0.0
          %1831 = vmatpush1.msra.mxu0 0.0
          %1832 = vmatprep.subr.mxu0 0.0
          %1833 = vmatpush1.msra.mxu0 0.0
          %1834 = vmatprep.subr.mxu0 0.0
          %1835 = vmatpush1.msra.mxu0 0.0
          %1836 = vmatprep.subr.mxu0 0.0
          %1837 = vmatpush1.msra.mxu0 0.0
          %1838 = vmatprep.subr.mxu0 0.0
          %1839 = vmatpush1.msra.mxu0 0.0
          %1840 = vmatprep.subr.mxu0 0.0
          %1841 = vmatpush1.msra.mxu0 0.0
          %1842 = vmatprep.subr.mxu0 0.0
          %1843 = vmatpush1.msra.mxu0 0.0
          %1844 = vmatprep.subr.mxu0 0.0
          %1845 = vmatpush1.msra.mxu0 0.0
          %1846 = vmatprep.subr.mxu0 0.0
          %1847 = vmatpush1.msra.mxu0 0.0
          %1848 = vmatprep.subr.mxu0 0.0
          %1849 = vmatpush1.msra.mxu0 0.0
          %1850 = vmatprep.subr.mxu0 0.0
          %1851 = vmatpush1.msra.mxu0 0.0
          %1852 = vmatprep.subr.mxu0 0.0
          %1853 = vmatpush1.msra.mxu0 0.0
          %1854 = vmatprep.subr.mxu0 0.0
          %1855 = vmatpush1.msra.mxu0 0.0
          %1856 = vmatprep.subr.mxu0 0.0
          %1857 = vmatpush1.msra.mxu0 0.0
          %1858 = vmatprep.subr.mxu0 0.0
          %1859 = vmatpush1.msra.mxu0 0.0
          %1860 = vmatprep.subr.mxu0 0.0
          %1861 = vmatpush1.msra.mxu0 0.0
          %1862 = vmatprep.mubr.f32.mxu0 0.0
          %1863 = vmatmul.mubr.f32.gmra.mrb[0].mxu0 %v1797
          %v1864 = vpop.f32.mrb[0].mxu0
          %v1865 = vadd.f32 0.0, %v1864
          %v1866 = vpop.f32.mrb[0].mxu0
          %1867 = vdwg.mxu0
          %1868 = vst [vmem:[#allocation19] sm:$0xff] %v1865
        $region108: #{tpu_custom_call.1} parent=59 // pred_fallthru
          _
        // Predicated region
        $region109: #{tpu_custom_call.1} parent=59 // pred_check
          %p1869 = pneg %p272
        $region110: #{tpu_custom_call.1} parent=59 // pred_check_branch
          %1871 = sbr.rel (%p1869) target = $region112
        $region111: #{tpu_custom_call.1} parent=59 // pred_region
          %s1873 = ssub.s32 128, 128
          %1874 = vsyncadd [#allocation7], %s1873
          %s1876 = sshll.u32 [#allocation19], 4
          %s1877 = int_to_ptr.vmem [resolvable:$true] %s1876
          %1879 = dma.vmem_to_hbm [thread:$0]  %s1877, 128, %s10, [#allocation7]
        $region112: #{tpu_custom_call.1} parent=59 // pred_fallthru
          _
        // Predicated region
        $region113: #{tpu_custom_call.1} parent=59 // pred_check
          %p1880 = pneg %p272
        $region114: #{tpu_custom_call.1} parent=59 // pred_check_branch
          %1882 = sbr.rel (%p1880) target = $region116
        $region115: #{tpu_custom_call.1} parent=59 // pred_region
          %1883 = dma.done [#allocation7], 128
        $region116: #{tpu_custom_call.1} parent=59 // pred_fallthru
          _
      $region60: #{tpu_custom_call.1} parent=5 // pred_fallthru
        _
      %p1884 = scmp.le.s32.totalorder 2, %s22
      // Predicated region
      $region117: #{tpu_custom_call.1} parent=5 // pred_check
        %p1885 = pneg %p1884
      $region118: #{tpu_custom_call.1} parent=5 // pred_check_branch
        %1887 = sbr.rel (%p1885) target = $region120
      $region119: #{tpu_custom_call.1} parent=5 // pred_region
        %s1888 = ssub.s32 %s22, 2
      $region120: #{tpu_custom_call.1} parent=5 // pred_fallthru
        _
    $region6: #{tpu_custom_call.1} parent=1 // loop_footer
      %s26 = sadd.s32 1, %s22
    $region7: #{tpu_custom_call.1} parent=1 // loop_footer_branch
      %21 = sbr.rel target = $region3
    $region8: #{tpu_custom_call.1} parent=1 // loop_exit
      _
    %1889 = vsyncpa [#allocation6], 1
    %s1890 = scalar_lea.sflag [#allocation6], 1
    %1891 = vsyncpa %s1890, 1
    %1892 = vsyncpa [#allocation9], 1
    %1893 = vsyncpa [#allocation12], 1
    %1894 = vsyncpa [#allocation15], 1
    %1895 = vsyncpa [#allocation18], 1
    %1896 = vsyncpa [#allocation7], 1
    %s1897 = scalar_lea.sflag [#allocation7], 1
    %1898 = vsyncpa %s1897, 1

</llo_original>
